<compile_context>
chip_gen: v7x
topology: tpu7x:2x2x1
jax: 0.10.0
libtpu: 0.0.40
codegen_flags: <defaults>
</compile_context>

<pallas_src>
from math import ceil, sqrt

import numpy as np
import jax
import jax.numpy as jnp
from jax import lax
from jax.experimental import pallas as pl
from jax.experimental.pallas import tpu as pltpu


# ----------------------------------------------------------------------------
# Fused kernel: act[K, TB] -> 4x (A_l @ act + bias, GELU) -> Linear matmul.
# ----------------------------------------------------------------------------
def _gelu_exact(x):
    # PyTorch nn.GELU() default: 0.5 * x * (1 + erf(x / sqrt(2)))
    return 0.5 * x * (1.0 + lax.erf(x * (1.0 / sqrt(2.0))))


def _fused_encoder_kernel(x_ref, *refs):
    o_ref = refs[-1]                     # [lin_out, TB] output block
    param_refs = refs[:-1]               # (A_l, b_l) * 4  +  (W_lin, b_lin)
    num_layers = (len(param_refs) - 2) // 2

    act = x_ref[...].astype(jnp.float32)                      # [K0, TB]
    for li in range(num_layers):
        a_ref = param_refs[2 * li]                            # [M_l, K_l]  bf16
        b_ref = param_refs[2 * li + 1]                        # [M_l, 1]    f32
        z = jnp.dot(a_ref[...], act.astype(a_ref.dtype),
                    preferred_element_type=jnp.float32)       # [M_l, TB] f32 acc
        act = _gelu_exact(z + b_ref[...])                     # bias bcast over cols

    wl_ref = param_refs[-2]                                   # [lin_out, K4] bf16
    bl_ref = param_refs[-1]                                   # [lin_out, 1]  f32
    y = jnp.dot(wl_ref[...], act.astype(wl_ref.dtype),
                preferred_element_type=jnp.float32) + bl_ref[...]
    o_ref[...] = y.astype(o_ref.dtype)


# ----------------------------------------------------------------------------
# One-time prep: fold gather + conv weights into a dense per-layer operator.
# ----------------------------------------------------------------------------
def _make_gather_np(h, w):
    """0/1 matrices G[k, Mo, H*W]: tap k selection of a 3x3 / stride-2 / pad-1 conv."""
    ho, wo = (h - 1) // 2 + 1, (w - 1) // 2 + 1
    g = np.zeros((9, ho * wo, h * w), np.float32)
    for ki in range(3):
        for kj in range(3):
            k = ki * 3 + kj
            for oi in range(ho):
                ii = 2 * oi + ki - 1
                if ii < 0 or ii >= h:
                    continue
                for oj in range(wo):
                    jj = 2 * oj + kj - 1
                    if jj < 0 or jj >= w:
                        continue
                    g[k, oi * wo + oj, ii * w + jj] = 1.0
    return g, ho, wo


def prepare_params(params, input_size, c_in=1, num_layers=4,
                   mxu_dtype=jnp.bfloat16):
    """Returns (A0,b0, A1,b1, A2,b2, A3,b3, W_lin,b_lin), weights in mxu_dtype."""
    h = w = input_size
    cin = c_in
    flat = []
    for li in range(num_layers):
        w_oihw = np.asarray(params[f"conv{li}_w"], np.float32)  # [Cout, Cin, 3, 3]
        cout = w_oihw.shape[0]
        g, ho, wo = _make_gather_np(h, w)                        # [9, Mo, Sin]
        wk = w_oihw.reshape(cout, cin, 9)
        # A[(co,m),(ci,s)] = sum_k W[co,ci,k] * G[k,m,s]
        A = np.einsum("oik,kms->omis", wk, g).reshape(cout * ho * wo, cin * h * w)
        bias = np.repeat(np.asarray(params[f"conv{li}_b"], np.float32),
                         ho * wo).reshape(-1, 1)                 # [(co,m), 1]
        flat += [jnp.asarray(A, mxu_dtype), jnp.asarray(bias, jnp.float32)]
        h, w, cin = ho, wo, cout
    # Linear: torch's NCHW flatten order (c*S4 + s) already matches the feature
    # row order produced above, so lin_w is used as-is.
    lin_w = np.asarray(params["lin_w"], np.float32)              # [lin_out, C4*S4]
    lin_b = np.asarray(params["lin_b"], np.float32).reshape(-1, 1)
    flat += [jnp.asarray(lin_w, mxu_dtype), jnp.asarray(lin_b, jnp.float32)]
    return tuple(flat)


# ----------------------------------------------------------------------------
# Parameter construction (mirrors the module: N(0, 0.01) weights).
# ----------------------------------------------------------------------------
def init_params(key, input_size, c_in=1, c_hid=8, c_out=1, w_out=8):
    w_hid = ceil(input_size / 16)
    chans = [c_in, c_hid, 2 * c_hid, 4 * c_hid, 8 * c_hid]
    params = {}
    keys = jax.random.split(key, 10)
    for li in range(4):
        ci, co = chans[li], chans[li + 1]
        params[f"conv{li}_w"] = 0.01 * jax.random.normal(
            keys[2 * li], (co, ci, 3, 3), jnp.float32)
        params[f"conv{li}_b"] = 0.01 * jax.random.normal(
            keys[2 * li + 1], (co,), jnp.float32)
    lin_in = w_hid * w_hid * 8 * c_hid
    lin_out = c_out * w_out * w_out
    params["lin_w"] = 0.01 * jax.random.normal(keys[8], (lin_out, lin_in), jnp.float32)
    params["lin_b"] = 0.01 * jax.random.normal(keys[9], (lin_out,), jnp.float32)
    return params


# ----------------------------------------------------------------------------
# Forward: single fused pallas_call, batch tiled onto the lane/N dimension.
# ----------------------------------------------------------------------------
def cnn_encoder_forward(prepared, x_nchw, batch_tile=128):
    B = x_nchw.shape[0]
    K0 = int(np.prod(x_nchw.shape[1:]))                 # Cin*H*W features/image
    lin_out = prepared[-1].shape[0]

    # NCHW flatten (c-major, matches the A0 column order), images as columns.
    x_cols = x_nchw.reshape(B, K0).T.astype(jnp.float32)          # [K0, B]

    if B >= batch_tile:
        TB = batch_tile                                  # 128-lane dense columns
        Bpad = ((B + TB - 1) // TB) * TB
        if Bpad != B:
            x_cols = jnp.pad(x_cols, ((0, 0), (0, Bpad - B)))
    else:
        TB = B                                           # single full-array block
        Bpad = B

    in_specs = [pl.BlockSpec((K0, TB), lambda b: (0, b))]
    for arr in prepared:                                 # weights: constant blocks
        in_specs.append(pl.BlockSpec(arr.shape, lambda b: (0, 0)))

    out = pl.pallas_call(
        _fused_encoder_kernel,
        out_shape=jax.ShapeDtypeStruct((lin_out, Bpad), jnp.float32),
        grid=(Bpad // TB,),
        in_specs=in_specs,
        out_specs=pl.BlockSpec((lin_out, TB), lambda b: (0, b)),
        compiler_params=pltpu.CompilerParams(
            dimension_semantics=("parallel",)),
    )(x_cols, *prepared)
    return out[:, :B].T                                  # [B, lin_out]


# ----------------------------------------------------------------------------
# Independent reference (XLA conv, f32) for the correctness check.
# ----------------------------------------------------------------------------
def _reference_forward(params, x_nchw):
    x = x_nchw.astype(jnp.float32)
    for li in range(4):
        w = params[f"conv{li}_w"]
        b = params[f"conv{li}_b"]
        x = lax.conv_general_dilated(
            x, w, window_strides=(2, 2), padding=((1, 1), (1, 1)),
            dimension_numbers=("NCHW", "OIHW", "NCHW"),
            precision=lax.Precision.HIGHEST)
        x = x + b[None, :, None, None]
        x = _gelu_exact(x)
    feat = x.reshape(x.shape[0], -1)
    return jnp.dot(feat, params["lin_w"].T,
                   precision=lax.Precision.HIGHEST) + params["lin_b"]


if __name__ == "__main__":
    input_size = 16
    B, c_in, c_hid, c_out, w_out = 2, 1, 8, 1, 8

    key = jax.random.PRNGKey(0)
    pkey, xkey = jax.random.split(key)
    params = init_params(pkey, input_size, c_in=c_in, c_hid=c_hid,
                         c_out=c_out, w_out=w_out)
    prepared = prepare_params(params, input_size, c_in=c_in)   # one-time fold
    x = jax.random.normal(xkey, (B, c_in, input_size, input_size), jnp.float32)

    y = jax.jit(cnn_encoder_forward)(prepared, x)
    y = jax.block_until_ready(y)

    assert y.shape == (B, c_out * w_out * w_out), y.shape
    assert jnp.all(jnp.isfinite(y))

    # bf16 MXU operands -> widened (but still tight) tolerance vs the f32 reference.
    y_ref = _reference_forward(params, x)
    np.testing.assert_allclose(np.asarray(y), np.asarray(y_ref),
                               rtol=2e-2, atol=1e-4)
    print("KERNEL_OK")
</pallas_src>

<mosaic_0001>
module attributes {stable_mosaic.version = 11 : i64} {
  func.func @_fused_encoder_kernel(%arg0: i32, %arg1: memref<256x2xf32, #tpu.memory_space<vmem>>, %arg2: memref<512x256xbf16, #tpu.memory_space<vmem>>, %arg3: memref<512x1xf32, #tpu.memory_space<vmem>>, %arg4: memref<256x512xbf16, #tpu.memory_space<vmem>>, %arg5: memref<256x1xf32, #tpu.memory_space<vmem>>, %arg6: memref<128x256xbf16, #tpu.memory_space<vmem>>, %arg7: memref<128x1xf32, #tpu.memory_space<vmem>>, %arg8: memref<64x128xbf16, #tpu.memory_space<vmem>>, %arg9: memref<64x1xf32, #tpu.memory_space<vmem>>, %arg10: memref<64x64xbf16, #tpu.memory_space<vmem>>, %arg11: memref<64x1xf32, #tpu.memory_space<vmem>>, %arg12: memref<64x2xf32, #tpu.memory_space<vmem>>) attributes {dimension_semantics = [#tpu.dimension_semantics<parallel>], iteration_bounds = array<i64: 1>, scalar_prefetch = 0 : i64, scratch_operands = 0 : i64, tpu.core_type = #tpu.core_type<tc>, window_params = [{transform_indices = @transform_0, window_bounds = array<i64: 256, 2>}, {pipeline_mode = #tpu.pipeline_mode<synchronous>, transform_indices = @transform_1, window_bounds = array<i64: 512, 256>}, {pipeline_mode = #tpu.pipeline_mode<synchronous>, transform_indices = @transform_2, window_bounds = array<i64: 512, 1>}, {pipeline_mode = #tpu.pipeline_mode<synchronous>, transform_indices = @transform_3, window_bounds = array<i64: 256, 512>}, {pipeline_mode = #tpu.pipeline_mode<synchronous>, transform_indices = @transform_4, window_bounds = array<i64: 256, 1>}, {pipeline_mode = #tpu.pipeline_mode<synchronous>, transform_indices = @transform_5, window_bounds = array<i64: 128, 256>}, {pipeline_mode = #tpu.pipeline_mode<synchronous>, transform_indices = @transform_6, window_bounds = array<i64: 128, 1>}, {pipeline_mode = #tpu.pipeline_mode<synchronous>, transform_indices = @transform_7, window_bounds = array<i64: 64, 128>}, {pipeline_mode = #tpu.pipeline_mode<synchronous>, transform_indices = @transform_8, window_bounds = array<i64: 64, 1>}, {pipeline_mode = #tpu.pipeline_mode<synchronous>, transform_indices = @transform_9, window_bounds = array<i64: 64, 64>}, {pipeline_mode = #tpu.pipeline_mode<synchronous>, transform_indices = @transform_10, window_bounds = array<i64: 64, 1>}, {transform_indices = @transform_11, window_bounds = array<i64: 64, 2>}]} {
    %c0 = arith.constant 0 : index
    %c0_0 = arith.constant 0 : index
    %0 = vector.load %arg1[%c0, %c0_0] : memref<256x2xf32, #tpu.memory_space<vmem>>, vector<256x2xf32>
    %c0_1 = arith.constant 0 : index
    %c0_2 = arith.constant 0 : index
    %1 = vector.load %arg2[%c0_1, %c0_2] : memref<512x256xbf16, #tpu.memory_space<vmem>>, vector<512x256xbf16>
    %2 = arith.truncf %0 : vector<256x2xf32> to vector<256x2xbf16>
    %cst = arith.constant dense<0.000000e+00> : vector<512x2xf32>
    %3 = tpu.matmul %1, %2, %cst {dimension_numbers = #tpu.dot_dimension_numbers<[1], [0], [0], [1], [0, 0, 1, 1], [], []>} : vector<512x256xbf16>, vector<256x2xbf16>, vector<512x2xf32> -> vector<512x2xf32>
    %c0_3 = arith.constant 0 : index
    %c0_4 = arith.constant 0 : index
    %4 = vector.load %arg3[%c0_3, %c0_4] : memref<512x1xf32, #tpu.memory_space<vmem>>, vector<512x1xf32>
    %5 = vector.broadcast %4 : vector<512x1xf32> to vector<512x2xf32>
    %6 = arith.addf %3, %5 : vector<512x2xf32>
    %cst_5 = arith.constant 5.000000e-01 : f32
    %7 = vector.broadcast %cst_5 : f32 to vector<512x2xf32>
    %8 = arith.mulf %7, %6 : vector<512x2xf32>
    %cst_6 = arith.constant 0.707106769 : f32
    %9 = vector.broadcast %cst_6 : f32 to vector<512x2xf32>
    %10 = arith.mulf %6, %9 : vector<512x2xf32>
    %11 = math.erf %10 : vector<512x2xf32>
    %cst_7 = arith.constant 1.000000e+00 : f32
    %12 = vector.broadcast %cst_7 : f32 to vector<512x2xf32>
    %13 = arith.addf %12, %11 : vector<512x2xf32>
    %14 = arith.mulf %8, %13 : vector<512x2xf32>
    %c0_8 = arith.constant 0 : index
    %c0_9 = arith.constant 0 : index
    %15 = vector.load %arg4[%c0_8, %c0_9] : memref<256x512xbf16, #tpu.memory_space<vmem>>, vector<256x512xbf16>
    %16 = arith.truncf %14 : vector<512x2xf32> to vector<512x2xbf16>
    %cst_10 = arith.constant dense<0.000000e+00> : vector<256x2xf32>
    %17 = tpu.matmul %15, %16, %cst_10 {dimension_numbers = #tpu.dot_dimension_numbers<[1], [0], [0], [1], [0, 0, 1, 1], [], []>} : vector<256x512xbf16>, vector<512x2xbf16>, vector<256x2xf32> -> vector<256x2xf32>
    %c0_11 = arith.constant 0 : index
    %c0_12 = arith.constant 0 : index
    %18 = vector.load %arg5[%c0_11, %c0_12] : memref<256x1xf32, #tpu.memory_space<vmem>>, vector<256x1xf32>
    %19 = vector.broadcast %18 : vector<256x1xf32> to vector<256x2xf32>
    %20 = arith.addf %17, %19 : vector<256x2xf32>
    %cst_13 = arith.constant 5.000000e-01 : f32
    %21 = vector.broadcast %cst_13 : f32 to vector<256x2xf32>
    %22 = arith.mulf %21, %20 : vector<256x2xf32>
    %cst_14 = arith.constant 0.707106769 : f32
    %23 = vector.broadcast %cst_14 : f32 to vector<256x2xf32>
    %24 = arith.mulf %20, %23 : vector<256x2xf32>
    %25 = math.erf %24 : vector<256x2xf32>
    %cst_15 = arith.constant 1.000000e+00 : f32
    %26 = vector.broadcast %cst_15 : f32 to vector<256x2xf32>
    %27 = arith.addf %26, %25 : vector<256x2xf32>
    %28 = arith.mulf %22, %27 : vector<256x2xf32>
    %c0_16 = arith.constant 0 : index
    %c0_17 = arith.constant 0 : index
    %29 = vector.load %arg6[%c0_16, %c0_17] : memref<128x256xbf16, #tpu.memory_space<vmem>>, vector<128x256xbf16>
    %30 = arith.truncf %28 : vector<256x2xf32> to vector<256x2xbf16>
    %cst_18 = arith.constant dense<0.000000e+00> : vector<128x2xf32>
    %31 = tpu.matmul %29, %30, %cst_18 {dimension_numbers = #tpu.dot_dimension_numbers<[1], [0], [0], [1], [0, 0, 1, 1], [], []>} : vector<128x256xbf16>, vector<256x2xbf16>, vector<128x2xf32> -> vector<128x2xf32>
    %c0_19 = arith.constant 0 : index
    %c0_20 = arith.constant 0 : index
    %32 = vector.load %arg7[%c0_19, %c0_20] : memref<128x1xf32, #tpu.memory_space<vmem>>, vector<128x1xf32>
    %33 = vector.broadcast %32 : vector<128x1xf32> to vector<128x2xf32>
    %34 = arith.addf %31, %33 : vector<128x2xf32>
    %cst_21 = arith.constant 5.000000e-01 : f32
    %35 = vector.broadcast %cst_21 : f32 to vector<128x2xf32>
    %36 = arith.mulf %35, %34 : vector<128x2xf32>
    %cst_22 = arith.constant 0.707106769 : f32
    %37 = vector.broadcast %cst_22 : f32 to vector<128x2xf32>
    %38 = arith.mulf %34, %37 : vector<128x2xf32>
    %39 = math.erf %38 : vector<128x2xf32>
    %cst_23 = arith.constant 1.000000e+00 : f32
    %40 = vector.broadcast %cst_23 : f32 to vector<128x2xf32>
    %41 = arith.addf %40, %39 : vector<128x2xf32>
    %42 = arith.mulf %36, %41 : vector<128x2xf32>
    %c0_24 = arith.constant 0 : index
    %c0_25 = arith.constant 0 : index
    %43 = vector.load %arg8[%c0_24, %c0_25] : memref<64x128xbf16, #tpu.memory_space<vmem>>, vector<64x128xbf16>
    %44 = arith.truncf %42 : vector<128x2xf32> to vector<128x2xbf16>
    %cst_26 = arith.constant dense<0.000000e+00> : vector<64x2xf32>
    %45 = tpu.matmul %43, %44, %cst_26 {dimension_numbers = #tpu.dot_dimension_numbers<[1], [0], [0], [1], [0, 0, 1, 1], [], []>} : vector<64x128xbf16>, vector<128x2xbf16>, vector<64x2xf32> -> vector<64x2xf32>
    %c0_27 = arith.constant 0 : index
    %c0_28 = arith.constant 0 : index
    %46 = vector.load %arg9[%c0_27, %c0_28] : memref<64x1xf32, #tpu.memory_space<vmem>>, vector<64x1xf32>
    %47 = vector.broadcast %46 : vector<64x1xf32> to vector<64x2xf32>
    %48 = arith.addf %45, %47 : vector<64x2xf32>
    %cst_29 = arith.constant 5.000000e-01 : f32
    %49 = vector.broadcast %cst_29 : f32 to vector<64x2xf32>
    %50 = arith.mulf %49, %48 : vector<64x2xf32>
    %cst_30 = arith.constant 0.707106769 : f32
    %51 = vector.broadcast %cst_30 : f32 to vector<64x2xf32>
    %52 = arith.mulf %48, %51 : vector<64x2xf32>
    %53 = math.erf %52 : vector<64x2xf32>
    %cst_31 = arith.constant 1.000000e+00 : f32
    %54 = vector.broadcast %cst_31 : f32 to vector<64x2xf32>
    %55 = arith.addf %54, %53 : vector<64x2xf32>
    %56 = arith.mulf %50, %55 : vector<64x2xf32>
    %c0_32 = arith.constant 0 : index
    %c0_33 = arith.constant 0 : index
    %57 = vector.load %arg10[%c0_32, %c0_33] : memref<64x64xbf16, #tpu.memory_space<vmem>>, vector<64x64xbf16>
    %58 = arith.truncf %56 : vector<64x2xf32> to vector<64x2xbf16>
    %cst_34 = arith.constant dense<0.000000e+00> : vector<64x2xf32>
    %59 = tpu.matmul %57, %58, %cst_34 {dimension_numbers = #tpu.dot_dimension_numbers<[1], [0], [0], [1], [0, 0, 1, 1], [], []>} : vector<64x64xbf16>, vector<64x2xbf16>, vector<64x2xf32> -> vector<64x2xf32>
    %c0_35 = arith.constant 0 : index
    %c0_36 = arith.constant 0 : index
    %60 = vector.load %arg11[%c0_35, %c0_36] : memref<64x1xf32, #tpu.memory_space<vmem>>, vector<64x1xf32>
    %61 = vector.broadcast %60 : vector<64x1xf32> to vector<64x2xf32>
    %62 = arith.addf %59, %61 : vector<64x2xf32>
    %c0_37 = arith.constant 0 : index
    %c0_38 = arith.constant 0 : index
    %63 = vector.load %arg12[%c0_37, %c0_38] : memref<64x2xf32, #tpu.memory_space<vmem>>, vector<64x2xf32>
    tpu.vector_store %arg12[%c0_37, %c0_38], %62 {strides = array<i32>} : memref<64x2xf32, #tpu.memory_space<vmem>>, vector<64x2xf32>,
    return
  }
  func.func @transform_0(%arg0: i32) -> (i32, i32) {
    %c0_i32 = arith.constant 0 : i32
    %c0_i32_0 = arith.constant 0 : i32
    return %c0_i32, %arg0 : i32, i32
  }
  func.func @transform_1(%arg0: i32) -> (i32, i32) {
    %c0_i32 = arith.constant 0 : i32
    %c0_i32_0 = arith.constant 0 : i32
    %c0_i32_1 = arith.constant 0 : i32
    return %c0_i32, %c0_i32_0 : i32, i32
  }
  func.func @transform_2(%arg0: i32) -> (i32, i32) {
    %c0_i32 = arith.constant 0 : i32
    %c0_i32_0 = arith.constant 0 : i32
    %c0_i32_1 = arith.constant 0 : i32
    return %c0_i32, %c0_i32_0 : i32, i32
  }
  func.func @transform_3(%arg0: i32) -> (i32, i32) {
    %c0_i32 = arith.constant 0 : i32
    %c0_i32_0 = arith.constant 0 : i32
    %c0_i32_1 = arith.constant 0 : i32
    return %c0_i32, %c0_i32_0 : i32, i32
  }
  func.func @transform_4(%arg0: i32) -> (i32, i32) {
    %c0_i32 = arith.constant 0 : i32
    %c0_i32_0 = arith.constant 0 : i32
    %c0_i32_1 = arith.constant 0 : i32
    return %c0_i32, %c0_i32_0 : i32, i32
  }
  func.func @transform_5(%arg0: i32) -> (i32, i32) {
    %c0_i32 = arith.constant 0 : i32
    %c0_i32_0 = arith.constant 0 : i32
    %c0_i32_1 = arith.constant 0 : i32
    return %c0_i32, %c0_i32_0 : i32, i32
  }
  func.func @transform_6(%arg0: i32) -> (i32, i32) {
    %c0_i32 = arith.constant 0 : i32
    %c0_i32_0 = arith.constant 0 : i32
    %c0_i32_1 = arith.constant 0 : i32
    return %c0_i32, %c0_i32_0 : i32, i32
  }
  func.func @transform_7(%arg0: i32) -> (i32, i32) {
    %c0_i32 = arith.constant 0 : i32
    %c0_i32_0 = arith.constant 0 : i32
    %c0_i32_1 = arith.constant 0 : i32
    return %c0_i32, %c0_i32_0 : i32, i32
  }
  func.func @transform_8(%arg0: i32) -> (i32, i32) {
    %c0_i32 = arith.constant 0 : i32
    %c0_i32_0 = arith.constant 0 : i32
    %c0_i32_1 = arith.constant 0 : i32
    return %c0_i32, %c0_i32_0 : i32, i32
  }
  func.func @transform_9(%arg0: i32) -> (i32, i32) {
    %c0_i32 = arith.constant 0 : i32
    %c0_i32_0 = arith.constant 0 : i32
    %c0_i32_1 = arith.constant 0 : i32
    return %c0_i32, %c0_i32_0 : i32, i32
  }
  func.func @transform_10(%arg0: i32) -> (i32, i32) {
    %c0_i32 = arith.constant 0 : i32
    %c0_i32_0 = arith.constant 0 : i32
    %c0_i32_1 = arith.constant 0 : i32
    return %c0_i32, %c0_i32_0 : i32, i32
  }
  func.func @transform_11(%arg0: i32) -> (i32, i32) {
    %c0_i32 = arith.constant 0 : i32
    %c0_i32_0 = arith.constant 0 : i32
    return %c0_i32, %arg0 : i32, i32
  }
}

</mosaic_0001>

<llo_original>
// kernel: cnn_encoder_forward.1
$region0: #{cnn_encoder_forward.1}
  #allocation0 [shape = 'u32[]', space=smem, size = 0x4, offset = 0x4, fixed_abs, tag = 'smem constant byte address 0x4 - core index']
  #allocation1 [shape = 'u32[144,128]{1,0:T(1,128)}', space=vmem, size = 0x12000, scoped, tag = 'internal scratch']
  %s0 = inlined_call_operand.vmem [shape: f32[256,2], index: 0, kind: input, shape index: {}]
  %s1 = inlined_call_operand.vmem [shape: bf16[512,256], index: 1, kind: input, shape index: {}]
  %s2 = inlined_call_operand.vmem [shape: f32[512,1], index: 2, kind: input, shape index: {}]
  %s3 = inlined_call_operand.vmem [shape: bf16[256,512], index: 3, kind: input, shape index: {}]
  %s4 = inlined_call_operand.vmem [shape: f32[256,1], index: 4, kind: input, shape index: {}]
  %s5 = inlined_call_operand.vmem [shape: bf16[128,256], index: 5, kind: input, shape index: {}]
  %s6 = inlined_call_operand.vmem [shape: f32[128,1], index: 6, kind: input, shape index: {}]
  %s7 = inlined_call_operand.vmem [shape: bf16[64,128], index: 7, kind: input, shape index: {}]
  %s8 = inlined_call_operand.vmem [shape: f32[64,1], index: 8, kind: input, shape index: {}]
  %s9 = inlined_call_operand.vmem [shape: bf16[64,64], index: 9, kind: input, shape index: {}]
  %s10 = inlined_call_operand.vmem [shape: f32[64,1], index: 10, kind: input, shape index: {}]
  %s11 = inlined_call_operand.vmem [shape: f32[64,2], index: 11, kind: output, shape index: {}]
  %s12 = sld [smem:[#allocation0]]
  $region54: #{cnn_encoder_forward.1} parent=0
    _
  %s14 = ssub.s32 1, %s12
  %s15 = scalar_select 0, %s14, %s12
  // Predicated region
  $region2: #{cnn_encoder_forward.1} parent=0 // pred_check
    _
  $region3: #{cnn_encoder_forward.1} parent=0 // pred_check_branch
    %17 = sbr.rel (0) target = $region5
  $region4: #{cnn_encoder_forward.1} parent=0 // pred_region
    _
  $region5: #{cnn_encoder_forward.1} parent=0 // pred_fallthru
    _
  // Predicated region
  $region6: #{cnn_encoder_forward.1} parent=0 // pred_check
    _
  $region7: #{cnn_encoder_forward.1} parent=0 // pred_check_branch
    %19 = sbr.rel (0) target = $region9
  $region8: #{cnn_encoder_forward.1} parent=0 // pred_region
    _
  $region9: #{cnn_encoder_forward.1} parent=0 // pred_fallthru
    _
  // Predicated region
  $region10: #{cnn_encoder_forward.1} parent=0 // pred_check
    _
  $region11: #{cnn_encoder_forward.1} parent=0 // pred_check_branch
    %21 = sbr.rel (0) target = $region13
  $region12: #{cnn_encoder_forward.1} parent=0 // pred_region
    _
  $region13: #{cnn_encoder_forward.1} parent=0 // pred_fallthru
    _
  // Predicated region
  $region14: #{cnn_encoder_forward.1} parent=0 // pred_check
    _
  $region15: #{cnn_encoder_forward.1} parent=0 // pred_check_branch
    %23 = sbr.rel (0) target = $region17
  $region16: #{cnn_encoder_forward.1} parent=0 // pred_region
    _
  $region17: #{cnn_encoder_forward.1} parent=0 // pred_fallthru
    _
  // Predicated region
  $region18: #{cnn_encoder_forward.1} parent=0 // pred_check
    _
  $region19: #{cnn_encoder_forward.1} parent=0 // pred_check_branch
    %25 = sbr.rel (0) target = $region21
  $region20: #{cnn_encoder_forward.1} parent=0 // pred_region
    _
  $region21: #{cnn_encoder_forward.1} parent=0 // pred_fallthru
    _
  // Predicated region
  $region22: #{cnn_encoder_forward.1} parent=0 // pred_check
    _
  $region23: #{cnn_encoder_forward.1} parent=0 // pred_check_branch
    %27 = sbr.rel (0) target = $region25
  $region24: #{cnn_encoder_forward.1} parent=0 // pred_region
    _
  $region25: #{cnn_encoder_forward.1} parent=0 // pred_fallthru
    _
  // Predicated region
  $region26: #{cnn_encoder_forward.1} parent=0 // pred_check
    _
  $region27: #{cnn_encoder_forward.1} parent=0 // pred_check_branch
    %29 = sbr.rel (0) target = $region29
  $region28: #{cnn_encoder_forward.1} parent=0 // pred_region
    _
  $region29: #{cnn_encoder_forward.1} parent=0 // pred_fallthru
    _
  // Predicated region
  $region30: #{cnn_encoder_forward.1} parent=0 // pred_check
    _
  $region31: #{cnn_encoder_forward.1} parent=0 // pred_check_branch
    %31 = sbr.rel (0) target = $region33
  $region32: #{cnn_encoder_forward.1} parent=0 // pred_region
    _
  $region33: #{cnn_encoder_forward.1} parent=0 // pred_fallthru
    _
  // Predicated region
  $region34: #{cnn_encoder_forward.1} parent=0 // pred_check
    _
  $region35: #{cnn_encoder_forward.1} parent=0 // pred_check_branch
    %33 = sbr.rel (0) target = $region37
  $region36: #{cnn_encoder_forward.1} parent=0 // pred_region
    _
  $region37: #{cnn_encoder_forward.1} parent=0 // pred_fallthru
    _
  // Predicated region
  $region38: #{cnn_encoder_forward.1} parent=0 // pred_check
    _
  $region39: #{cnn_encoder_forward.1} parent=0 // pred_check_branch
    %35 = sbr.rel (0) target = $region41
  $region40: #{cnn_encoder_forward.1} parent=0 // pred_region
    _
  $region41: #{cnn_encoder_forward.1} parent=0 // pred_fallthru
    _
  // Predicated region
  $region42: #{cnn_encoder_forward.1} parent=0 // pred_check
    _
  $region43: #{cnn_encoder_forward.1} parent=0 // pred_check_branch
    %37 = sbr.rel (0) target = $region45
  $region44: #{cnn_encoder_forward.1} parent=0 // pred_region
    _
  $region45: #{cnn_encoder_forward.1} parent=0 // pred_fallthru
    _
  %v39 = vld [vmem:[%s0] sm:$0xff]
  %v40 = vld [vmem:[%s0 + $0x8] sm:$0xff]
  %v41 = vld [vmem:[%s0 + $0x10] sm:$0xff]
  %v42 = vld [vmem:[%s0 + $0x18] sm:$0xff]
  %v43 = vld [vmem:[%s0 + $0x20] sm:$0xff]
  %v44 = vld [vmem:[%s0 + $0x28] sm:$0xff]
  %v45 = vld [vmem:[%s0 + $0x30] sm:$0xff]
  %v46 = vld [vmem:[%s0 + $0x38] sm:$0xff]
  %v47 = vld [vmem:[%s0 + $0x40] sm:$0xff]
  %v48 = vld [vmem:[%s0 + $0x48] sm:$0xff]
  %v49 = vld [vmem:[%s0 + $0x50] sm:$0xff]
  %v50 = vld [vmem:[%s0 + $0x58] sm:$0xff]
  %v51 = vld [vmem:[%s0 + $0x60] sm:$0xff]
  %v52 = vld [vmem:[%s0 + $0x68] sm:$0xff]
  %v53 = vld [vmem:[%s0 + $0x70] sm:$0xff]
  %v54 = vld [vmem:[%s0 + $0x78] sm:$0xff]
  %v55 = vld [vmem:[%s0 + $0x80] sm:$0xff]
  %v56 = vld [vmem:[%s0 + $0x88] sm:$0xff]
  %v57 = vld [vmem:[%s0 + $0x90] sm:$0xff]
  %v58 = vld [vmem:[%s0 + $0x98] sm:$0xff]
  %v59 = vld [vmem:[%s0 + $0xa0] sm:$0xff]
  %v60 = vld [vmem:[%s0 + $0xa8] sm:$0xff]
  %v61 = vld [vmem:[%s0 + $0xb0] sm:$0xff]
  %v62 = vld [vmem:[%s0 + $0xb8] sm:$0xff]
  %v63 = vld [vmem:[%s0 + $0xc0] sm:$0xff]
  %v64 = vld [vmem:[%s0 + $0xc8] sm:$0xff]
  %v65 = vld [vmem:[%s0 + $0xd0] sm:$0xff]
  %v66 = vld [vmem:[%s0 + $0xd8] sm:$0xff]
  %v67 = vld [vmem:[%s0 + $0xe0] sm:$0xff]
  %v68 = vld [vmem:[%s0 + $0xe8] sm:$0xff]
  %v69 = vld [vmem:[%s0 + $0xf0] sm:$0xff]
  %v70 = vld [vmem:[%s0 + $0xf8] sm:$0xff]
  %v71 = vld [vmem:[%s1] sm:$0xff]
  %v72 = vld [vmem:[%s1 + $0x8] sm:$0xff]
  %v73 = vld [vmem:[%s1 + $0x10] sm:$0xff]
  %v74 = vld [vmem:[%s1 + $0x18] sm:$0xff]
  %v75 = vld [vmem:[%s1 + $0x20] sm:$0xff]
  %v76 = vld [vmem:[%s1 + $0x28] sm:$0xff]
  %v77 = vld [vmem:[%s1 + $0x30] sm:$0xff]
  %v78 = vld [vmem:[%s1 + $0x38] sm:$0xff]
  %v79 = vld [vmem:[%s1 + $0x40] sm:$0xff]
  %v80 = vld [vmem:[%s1 + $0x48] sm:$0xff]
  %v81 = vld [vmem:[%s1 + $0x50] sm:$0xff]
  %v82 = vld [vmem:[%s1 + $0x58] sm:$0xff]
  %v83 = vld [vmem:[%s1 + $0x60] sm:$0xff]
  %v84 = vld [vmem:[%s1 + $0x68] sm:$0xff]
  %v85 = vld [vmem:[%s1 + $0x70] sm:$0xff]
  %v86 = vld [vmem:[%s1 + $0x78] sm:$0xff]
  %v87 = vld [vmem:[%s1 + $0x80] sm:$0xff]
  %v88 = vld [vmem:[%s1 + $0x88] sm:$0xff]
  %v89 = vld [vmem:[%s1 + $0x90] sm:$0xff]
  %v90 = vld [vmem:[%s1 + $0x98] sm:$0xff]
  %v91 = vld [vmem:[%s1 + $0xa0] sm:$0xff]
  %v92 = vld [vmem:[%s1 + $0xa8] sm:$0xff]
  %v93 = vld [vmem:[%s1 + $0xb0] sm:$0xff]
  %v94 = vld [vmem:[%s1 + $0xb8] sm:$0xff]
  %v95 = vld [vmem:[%s1 + $0xc0] sm:$0xff]
  %v96 = vld [vmem:[%s1 + $0xc8] sm:$0xff]
  %v97 = vld [vmem:[%s1 + $0xd0] sm:$0xff]
  %v98 = vld [vmem:[%s1 + $0xd8] sm:$0xff]
  %v99 = vld [vmem:[%s1 + $0xe0] sm:$0xff]
  %v100 = vld [vmem:[%s1 + $0xe8] sm:$0xff]
  %v101 = vld [vmem:[%s1 + $0xf0] sm:$0xff]
  %v102 = vld [vmem:[%s1 + $0xf8] sm:$0xff]
  %v103 = vld [vmem:[%s1 + $0x100] sm:$0xff]
  %v104 = vld [vmem:[%s1 + $0x108] sm:$0xff]
  %v105 = vld [vmem:[%s1 + $0x110] sm:$0xff]
  %v106 = vld [vmem:[%s1 + $0x118] sm:$0xff]
  %v107 = vld [vmem:[%s1 + $0x120] sm:$0xff]
  %v108 = vld [vmem:[%s1 + $0x128] sm:$0xff]
  %v109 = vld [vmem:[%s1 + $0x130] sm:$0xff]
  %v110 = vld [vmem:[%s1 + $0x138] sm:$0xff]
  %v111 = vld [vmem:[%s1 + $0x140] sm:$0xff]
  %v112 = vld [vmem:[%s1 + $0x148] sm:$0xff]
  %v113 = vld [vmem:[%s1 + $0x150] sm:$0xff]
  %v114 = vld [vmem:[%s1 + $0x158] sm:$0xff]
  %v115 = vld [vmem:[%s1 + $0x160] sm:$0xff]
  %v116 = vld [vmem:[%s1 + $0x168] sm:$0xff]
  %v117 = vld [vmem:[%s1 + $0x170] sm:$0xff]
  %v118 = vld [vmem:[%s1 + $0x178] sm:$0xff]
  %v119 = vld [vmem:[%s1 + $0x180] sm:$0xff]
  %v120 = vld [vmem:[%s1 + $0x188] sm:$0xff]
  %v121 = vld [vmem:[%s1 + $0x190] sm:$0xff]
  %v122 = vld [vmem:[%s1 + $0x198] sm:$0xff]
  %v123 = vld [vmem:[%s1 + $0x1a0] sm:$0xff]
  %v124 = vld [vmem:[%s1 + $0x1a8] sm:$0xff]
  %v125 = vld [vmem:[%s1 + $0x1b0] sm:$0xff]
  %v126 = vld [vmem:[%s1 + $0x1b8] sm:$0xff]
  %v127 = vld [vmem:[%s1 + $0x1c0] sm:$0xff]
  %v128 = vld [vmem:[%s1 + $0x1c8] sm:$0xff]
  %v129 = vld [vmem:[%s1 + $0x1d0] sm:$0xff]
  %v130 = vld [vmem:[%s1 + $0x1d8] sm:$0xff]
  %v131 = vld [vmem:[%s1 + $0x1e0] sm:$0xff]
  %v132 = vld [vmem:[%s1 + $0x1e8] sm:$0xff]
  %v133 = vld [vmem:[%s1 + $0x1f0] sm:$0xff]
  %v134 = vld [vmem:[%s1 + $0x1f8] sm:$0xff]
  %v135 = vpack.c.bf16 %v40, %v39
  %v136 = vpack.c.bf16 %v42, %v41
  %v137 = vpack.c.bf16 %v44, %v43
  %v138 = vpack.c.bf16 %v46, %v45
  %v139 = vpack.c.bf16 %v48, %v47
  %v140 = vpack.c.bf16 %v50, %v49
  %v141 = vpack.c.bf16 %v52, %v51
  %v142 = vpack.c.bf16 %v54, %v53
  %v143 = vpack.c.bf16 %v56, %v55
  %v144 = vpack.c.bf16 %v58, %v57
  %v145 = vpack.c.bf16 %v60, %v59
  %v146 = vpack.c.bf16 %v62, %v61
  %v147 = vpack.c.bf16 %v64, %v63
  %v148 = vpack.c.bf16 %v66, %v65
  %v149 = vpack.c.bf16 %v68, %v67
  %v150 = vpack.c.bf16 %v70, %v69
  %v151 = vld [vmem:[%s2] sm:$0xff]
  %v152 = vld [vmem:[%s2 + $0x8] sm:$0xff]
  %v153 = vld [vmem:[%s2 + $0x10] sm:$0xff]
  %v154 = vld [vmem:[%s2 + $0x18] sm:$0xff]
  %v155 = vld [vmem:[%s2 + $0x20] sm:$0xff]
  %v156 = vld [vmem:[%s2 + $0x28] sm:$0xff]
  %v157 = vld [vmem:[%s2 + $0x30] sm:$0xff]
  %v158 = vld [vmem:[%s2 + $0x38] sm:$0xff]
  %v159 = vld [vmem:[%s2 + $0x40] sm:$0xff]
  %v160 = vld [vmem:[%s2 + $0x48] sm:$0xff]
  %v161 = vld [vmem:[%s2 + $0x50] sm:$0xff]
  %v162 = vld [vmem:[%s2 + $0x58] sm:$0xff]
  %v163 = vld [vmem:[%s2 + $0x60] sm:$0xff]
  %v164 = vld [vmem:[%s2 + $0x68] sm:$0xff]
  %v165 = vld [vmem:[%s2 + $0x70] sm:$0xff]
  %v166 = vld [vmem:[%s2 + $0x78] sm:$0xff]
  %v167 = vld [vmem:[%s2 + $0x80] sm:$0xff]
  %v168 = vld [vmem:[%s2 + $0x88] sm:$0xff]
  %v169 = vld [vmem:[%s2 + $0x90] sm:$0xff]
  %v170 = vld [vmem:[%s2 + $0x98] sm:$0xff]
  %v171 = vld [vmem:[%s2 + $0xa0] sm:$0xff]
  %v172 = vld [vmem:[%s2 + $0xa8] sm:$0xff]
  %v173 = vld [vmem:[%s2 + $0xb0] sm:$0xff]
  %v174 = vld [vmem:[%s2 + $0xb8] sm:$0xff]
  %v175 = vld [vmem:[%s2 + $0xc0] sm:$0xff]
  %v176 = vld [vmem:[%s2 + $0xc8] sm:$0xff]
  %v177 = vld [vmem:[%s2 + $0xd0] sm:$0xff]
  %v178 = vld [vmem:[%s2 + $0xd8] sm:$0xff]
  %v179 = vld [vmem:[%s2 + $0xe0] sm:$0xff]
  %v180 = vld [vmem:[%s2 + $0xe8] sm:$0xff]
  %v181 = vld [vmem:[%s2 + $0xf0] sm:$0xff]
  %v182 = vld [vmem:[%s2 + $0xf8] sm:$0xff]
  %v183 = vld [vmem:[%s2 + $0x100] sm:$0xff]
  %v184 = vld [vmem:[%s2 + $0x108] sm:$0xff]
  %v185 = vld [vmem:[%s2 + $0x110] sm:$0xff]
  %v186 = vld [vmem:[%s2 + $0x118] sm:$0xff]
  %v187 = vld [vmem:[%s2 + $0x120] sm:$0xff]
  %v188 = vld [vmem:[%s2 + $0x128] sm:$0xff]
  %v189 = vld [vmem:[%s2 + $0x130] sm:$0xff]
  %v190 = vld [vmem:[%s2 + $0x138] sm:$0xff]
  %v191 = vld [vmem:[%s2 + $0x140] sm:$0xff]
  %v192 = vld [vmem:[%s2 + $0x148] sm:$0xff]
  %v193 = vld [vmem:[%s2 + $0x150] sm:$0xff]
  %v194 = vld [vmem:[%s2 + $0x158] sm:$0xff]
  %v195 = vld [vmem:[%s2 + $0x160] sm:$0xff]
  %v196 = vld [vmem:[%s2 + $0x168] sm:$0xff]
  %v197 = vld [vmem:[%s2 + $0x170] sm:$0xff]
  %v198 = vld [vmem:[%s2 + $0x178] sm:$0xff]
  %v199 = vld [vmem:[%s2 + $0x180] sm:$0xff]
  %v200 = vld [vmem:[%s2 + $0x188] sm:$0xff]
  %v201 = vld [vmem:[%s2 + $0x190] sm:$0xff]
  %v202 = vld [vmem:[%s2 + $0x198] sm:$0xff]
  %v203 = vld [vmem:[%s2 + $0x1a0] sm:$0xff]
  %v204 = vld [vmem:[%s2 + $0x1a8] sm:$0xff]
  %v205 = vld [vmem:[%s2 + $0x1b0] sm:$0xff]
  %v206 = vld [vmem:[%s2 + $0x1b8] sm:$0xff]
  %v207 = vld [vmem:[%s2 + $0x1c0] sm:$0xff]
  %v208 = vld [vmem:[%s2 + $0x1c8] sm:$0xff]
  %v209 = vld [vmem:[%s2 + $0x1d0] sm:$0xff]
  %v210 = vld [vmem:[%s2 + $0x1d8] sm:$0xff]
  %v211 = vld [vmem:[%s2 + $0x1e0] sm:$0xff]
  %v212 = vld [vmem:[%s2 + $0x1e8] sm:$0xff]
  %v213 = vld [vmem:[%s2 + $0x1f0] sm:$0xff]
  %v214 = vld [vmem:[%s2 + $0x1f8] sm:$0xff]
  %216 = vset.pattern.permute.xlu0 0
  %217 = vperm.xlu0 %216, %v151
  %v218 = vpop.permute.xlu0 %217
  %221 = vset.pattern.permute.xlu0 0
  %222 = vperm.xlu0 %221, %v152
  %v223 = vpop.permute.xlu0 %222
  %226 = vset.pattern.permute.xlu0 0
  %227 = vperm.xlu0 %226, %v153
  %v228 = vpop.permute.xlu0 %227
  %231 = vset.pattern.permute.xlu0 0
  %232 = vperm.xlu0 %231, %v154
  %v233 = vpop.permute.xlu0 %232
  %236 = vset.pattern.permute.xlu0 0
  %237 = vperm.xlu0 %236, %v155
  %v238 = vpop.permute.xlu0 %237
  %241 = vset.pattern.permute.xlu0 0
  %242 = vperm.xlu0 %241, %v156
  %v243 = vpop.permute.xlu0 %242
  %246 = vset.pattern.permute.xlu0 0
  %247 = vperm.xlu0 %246, %v157
  %v248 = vpop.permute.xlu0 %247
  %251 = vset.pattern.permute.xlu0 0
  %252 = vperm.xlu0 %251, %v158
  %v253 = vpop.permute.xlu0 %252
  %256 = vset.pattern.permute.xlu0 0
  %257 = vperm.xlu0 %256, %v159
  %v258 = vpop.permute.xlu0 %257
  %261 = vset.pattern.permute.xlu0 0
  %262 = vperm.xlu0 %261, %v160
  %v263 = vpop.permute.xlu0 %262
  %266 = vset.pattern.permute.xlu0 0
  %267 = vperm.xlu0 %266, %v161
  %v268 = vpop.permute.xlu0 %267
  %271 = vset.pattern.permute.xlu0 0
  %272 = vperm.xlu0 %271, %v162
  %v273 = vpop.permute.xlu0 %272
  %276 = vset.pattern.permute.xlu0 0
  %277 = vperm.xlu0 %276, %v163
  %v278 = vpop.permute.xlu0 %277
  %281 = vset.pattern.permute.xlu0 0
  %282 = vperm.xlu0 %281, %v164
  %v283 = vpop.permute.xlu0 %282
  %286 = vset.pattern.permute.xlu0 0
  %287 = vperm.xlu0 %286, %v165
  %v288 = vpop.permute.xlu0 %287
  %291 = vset.pattern.permute.xlu0 0
  %292 = vperm.xlu0 %291, %v166
  %v293 = vpop.permute.xlu0 %292
  %296 = vset.pattern.permute.xlu0 0
  %297 = vperm.xlu0 %296, %v167
  %v298 = vpop.permute.xlu0 %297
  %301 = vset.pattern.permute.xlu0 0
  %302 = vperm.xlu0 %301, %v168
  %v303 = vpop.permute.xlu0 %302
  %306 = vset.pattern.permute.xlu0 0
  %307 = vperm.xlu0 %306, %v169
  %v308 = vpop.permute.xlu0 %307
  %311 = vset.pattern.permute.xlu0 0
  %312 = vperm.xlu0 %311, %v170
  %v313 = vpop.permute.xlu0 %312
  %316 = vset.pattern.permute.xlu0 0
  %317 = vperm.xlu0 %316, %v171
  %v318 = vpop.permute.xlu0 %317
  %321 = vset.pattern.permute.xlu0 0
  %322 = vperm.xlu0 %321, %v172
  %v323 = vpop.permute.xlu0 %322
  %326 = vset.pattern.permute.xlu0 0
  %327 = vperm.xlu0 %326, %v173
  %v328 = vpop.permute.xlu0 %327
  %331 = vset.pattern.permute.xlu0 0
  %332 = vperm.xlu0 %331, %v174
  %v333 = vpop.permute.xlu0 %332
  %336 = vset.pattern.permute.xlu0 0
  %337 = vperm.xlu0 %336, %v175
  %v338 = vpop.permute.xlu0 %337
  %341 = vset.pattern.permute.xlu0 0
  %342 = vperm.xlu0 %341, %v176
  %v343 = vpop.permute.xlu0 %342
  %346 = vset.pattern.permute.xlu0 0
  %347 = vperm.xlu0 %346, %v177
  %v348 = vpop.permute.xlu0 %347
  %351 = vset.pattern.permute.xlu0 0
  %352 = vperm.xlu0 %351, %v178
  %v353 = vpop.permute.xlu0 %352
  %356 = vset.pattern.permute.xlu0 0
  %357 = vperm.xlu0 %356, %v179
  %v358 = vpop.permute.xlu0 %357
  %361 = vset.pattern.permute.xlu0 0
  %362 = vperm.xlu0 %361, %v180
  %v363 = vpop.permute.xlu0 %362
  %366 = vset.pattern.permute.xlu0 0
  %367 = vperm.xlu0 %366, %v181
  %v368 = vpop.permute.xlu0 %367
  %371 = vset.pattern.permute.xlu0 0
  %372 = vperm.xlu0 %371, %v182
  %v373 = vpop.permute.xlu0 %372
  %376 = vset.pattern.permute.xlu0 0
  %377 = vperm.xlu0 %376, %v183
  %v378 = vpop.permute.xlu0 %377
  %381 = vset.pattern.permute.xlu0 0
  %382 = vperm.xlu0 %381, %v184
  %v383 = vpop.permute.xlu0 %382
  %386 = vset.pattern.permute.xlu0 0
  %387 = vperm.xlu0 %386, %v185
  %v388 = vpop.permute.xlu0 %387
  %391 = vset.pattern.permute.xlu0 0
  %392 = vperm.xlu0 %391, %v186
  %v393 = vpop.permute.xlu0 %392
  %396 = vset.pattern.permute.xlu0 0
  %397 = vperm.xlu0 %396, %v187
  %v398 = vpop.permute.xlu0 %397
  %401 = vset.pattern.permute.xlu0 0
  %402 = vperm.xlu0 %401, %v188
  %v403 = vpop.permute.xlu0 %402
  %406 = vset.pattern.permute.xlu0 0
  %407 = vperm.xlu0 %406, %v189
  %v408 = vpop.permute.xlu0 %407
  %411 = vset.pattern.permute.xlu0 0
  %412 = vperm.xlu0 %411, %v190
  %v413 = vpop.permute.xlu0 %412
  %416 = vset.pattern.permute.xlu0 0
  %417 = vperm.xlu0 %416, %v191
  %v418 = vpop.permute.xlu0 %417
  %421 = vset.pattern.permute.xlu0 0
  %422 = vperm.xlu0 %421, %v192
  %v423 = vpop.permute.xlu0 %422
  %426 = vset.pattern.permute.xlu0 0
  %427 = vperm.xlu0 %426, %v193
  %v428 = vpop.permute.xlu0 %427
  %431 = vset.pattern.permute.xlu0 0
  %432 = vperm.xlu0 %431, %v194
  %v433 = vpop.permute.xlu0 %432
  %436 = vset.pattern.permute.xlu0 0
  %437 = vperm.xlu0 %436, %v195
  %v438 = vpop.permute.xlu0 %437
  %441 = vset.pattern.permute.xlu0 0
  %442 = vperm.xlu0 %441, %v196
  %v443 = vpop.permute.xlu0 %442
  %446 = vset.pattern.permute.xlu0 0
  %447 = vperm.xlu0 %446, %v197
  %v448 = vpop.permute.xlu0 %447
  %451 = vset.pattern.permute.xlu0 0
  %452 = vperm.xlu0 %451, %v198
  %v453 = vpop.permute.xlu0 %452
  %456 = vset.pattern.permute.xlu0 0
  %457 = vperm.xlu0 %456, %v199
  %v458 = vpop.permute.xlu0 %457
  %461 = vset.pattern.permute.xlu0 0
  %462 = vperm.xlu0 %461, %v200
  %v463 = vpop.permute.xlu0 %462
  %466 = vset.pattern.permute.xlu0 0
  %467 = vperm.xlu0 %466, %v201
  %v468 = vpop.permute.xlu0 %467
  %471 = vset.pattern.permute.xlu0 0
  %472 = vperm.xlu0 %471, %v202
  %v473 = vpop.permute.xlu0 %472
  %476 = vset.pattern.permute.xlu0 0
  %477 = vperm.xlu0 %476, %v203
  %v478 = vpop.permute.xlu0 %477
  %481 = vset.pattern.permute.xlu0 0
  %482 = vperm.xlu0 %481, %v204
  %v483 = vpop.permute.xlu0 %482
  %486 = vset.pattern.permute.xlu0 0
  %487 = vperm.xlu0 %486, %v205
  %v488 = vpop.permute.xlu0 %487
  %491 = vset.pattern.permute.xlu0 0
  %492 = vperm.xlu0 %491, %v206
  %v493 = vpop.permute.xlu0 %492
  %496 = vset.pattern.permute.xlu0 0
  %497 = vperm.xlu0 %496, %v207
  %v498 = vpop.permute.xlu0 %497
  %501 = vset.pattern.permute.xlu0 0
  %502 = vperm.xlu0 %501, %v208
  %v503 = vpop.permute.xlu0 %502
  %506 = vset.pattern.permute.xlu0 0
  %507 = vperm.xlu0 %506, %v209
  %v508 = vpop.permute.xlu0 %507
  %511 = vset.pattern.permute.xlu0 0
  %512 = vperm.xlu0 %511, %v210
  %v513 = vpop.permute.xlu0 %512
  %516 = vset.pattern.permute.xlu0 0
  %517 = vperm.xlu0 %516, %v211
  %v518 = vpop.permute.xlu0 %517
  %521 = vset.pattern.permute.xlu0 0
  %522 = vperm.xlu0 %521, %v212
  %v523 = vpop.permute.xlu0 %522
  %526 = vset.pattern.permute.xlu0 0
  %527 = vperm.xlu0 %526, %v213
  %v528 = vpop.permute.xlu0 %527
  %531 = vset.pattern.permute.xlu0 0
  %532 = vperm.xlu0 %531, %v214
  %v533 = vpop.permute.xlu0 %532
  %v599 = vunpack.c.l.b16 %v71
  %v600 = vunpack.c.h.b16 %v71
  %v601 = vunpack.c.l.b16 %v72
  %v602 = vunpack.c.h.b16 %v72
  %v603 = vunpack.c.l.b16 %v73
  %v604 = vunpack.c.h.b16 %v73
  %v605 = vunpack.c.l.b16 %v74
  %v606 = vunpack.c.h.b16 %v74
  %v607 = vunpack.c.l.b16 %v75
  %v608 = vunpack.c.h.b16 %v75
  %v609 = vunpack.c.l.b16 %v76
  %v610 = vunpack.c.h.b16 %v76
  %v611 = vunpack.c.l.b16 %v77
  %v612 = vunpack.c.h.b16 %v77
  %v613 = vunpack.c.l.b16 %v78
  %v614 = vunpack.c.h.b16 %v78
  %v615 = vunpack.c.l.b16 %v79
  %v616 = vunpack.c.h.b16 %v79
  %v617 = vunpack.c.l.b16 %v80
  %v618 = vunpack.c.h.b16 %v80
  %v619 = vunpack.c.l.b16 %v81
  %v620 = vunpack.c.h.b16 %v81
  %v621 = vunpack.c.l.b16 %v82
  %v622 = vunpack.c.h.b16 %v82
  %v623 = vunpack.c.l.b16 %v83
  %v624 = vunpack.c.h.b16 %v83
  %v625 = vunpack.c.l.b16 %v84
  %v626 = vunpack.c.h.b16 %v84
  %v627 = vunpack.c.l.b16 %v85
  %v628 = vunpack.c.h.b16 %v85
  %v629 = vunpack.c.l.b16 %v86
  %v630 = vunpack.c.h.b16 %v86
  %v631 = vunpack.c.l.b16 %v87
  %v632 = vunpack.c.h.b16 %v87
  %v633 = vunpack.c.l.b16 %v88
  %v634 = vunpack.c.h.b16 %v88
  %v635 = vunpack.c.l.b16 %v89
  %v636 = vunpack.c.h.b16 %v89
  %v637 = vunpack.c.l.b16 %v90
  %v638 = vunpack.c.h.b16 %v90
  %v639 = vunpack.c.l.b16 %v91
  %v640 = vunpack.c.h.b16 %v91
  %v641 = vunpack.c.l.b16 %v92
  %v642 = vunpack.c.h.b16 %v92
  %v643 = vunpack.c.l.b16 %v93
  %v644 = vunpack.c.h.b16 %v93
  %v645 = vunpack.c.l.b16 %v94
  %v646 = vunpack.c.h.b16 %v94
  %v647 = vunpack.c.l.b16 %v95
  %v648 = vunpack.c.h.b16 %v95
  %v649 = vunpack.c.l.b16 %v96
  %v650 = vunpack.c.h.b16 %v96
  %v651 = vunpack.c.l.b16 %v97
  %v652 = vunpack.c.h.b16 %v97
  %v653 = vunpack.c.l.b16 %v98
  %v654 = vunpack.c.h.b16 %v98
  %v655 = vunpack.c.l.b16 %v99
  %v656 = vunpack.c.h.b16 %v99
  %v657 = vunpack.c.l.b16 %v100
  %v658 = vunpack.c.h.b16 %v100
  %v659 = vunpack.c.l.b16 %v101
  %v660 = vunpack.c.h.b16 %v101
  %v661 = vunpack.c.l.b16 %v102
  %v662 = vunpack.c.h.b16 %v102
  %v663 = vunpack.c.l.b16 %v103
  %v664 = vunpack.c.h.b16 %v103
  %v665 = vunpack.c.l.b16 %v104
  %v666 = vunpack.c.h.b16 %v104
  %v667 = vunpack.c.l.b16 %v105
  %v668 = vunpack.c.h.b16 %v105
  %v669 = vunpack.c.l.b16 %v106
  %v670 = vunpack.c.h.b16 %v106
  %v671 = vunpack.c.l.b16 %v107
  %v672 = vunpack.c.h.b16 %v107
  %v673 = vunpack.c.l.b16 %v108
  %v674 = vunpack.c.h.b16 %v108
  %v675 = vunpack.c.l.b16 %v109
  %v676 = vunpack.c.h.b16 %v109
  %v677 = vunpack.c.l.b16 %v110
  %v678 = vunpack.c.h.b16 %v110
  %v679 = vunpack.c.l.b16 %v111
  %v680 = vunpack.c.h.b16 %v111
  %v681 = vunpack.c.l.b16 %v112
  %v682 = vunpack.c.h.b16 %v112
  %v683 = vunpack.c.l.b16 %v113
  %v684 = vunpack.c.h.b16 %v113
  %v685 = vunpack.c.l.b16 %v114
  %v686 = vunpack.c.h.b16 %v114
  %v687 = vunpack.c.l.b16 %v115
  %v688 = vunpack.c.h.b16 %v115
  %v689 = vunpack.c.l.b16 %v116
  %v690 = vunpack.c.h.b16 %v116
  %v691 = vunpack.c.l.b16 %v117
  %v692 = vunpack.c.h.b16 %v117
  %v693 = vunpack.c.l.b16 %v118
  %v694 = vunpack.c.h.b16 %v118
  %v695 = vunpack.c.l.b16 %v119
  %v696 = vunpack.c.h.b16 %v119
  %v697 = vunpack.c.l.b16 %v120
  %v698 = vunpack.c.h.b16 %v120
  %v699 = vunpack.c.l.b16 %v121
  %v700 = vunpack.c.h.b16 %v121
  %v701 = vunpack.c.l.b16 %v122
  %v702 = vunpack.c.h.b16 %v122
  %v703 = vunpack.c.l.b16 %v123
  %v704 = vunpack.c.h.b16 %v123
  %v705 = vunpack.c.l.b16 %v124
  %v706 = vunpack.c.h.b16 %v124
  %v707 = vunpack.c.l.b16 %v125
  %v708 = vunpack.c.h.b16 %v125
  %v709 = vunpack.c.l.b16 %v126
  %v710 = vunpack.c.h.b16 %v126
  %v711 = vunpack.c.l.b16 %v127
  %v712 = vunpack.c.h.b16 %v127
  %v713 = vunpack.c.l.b16 %v128
  %v714 = vunpack.c.h.b16 %v128
  %v715 = vunpack.c.l.b16 %v129
  %v716 = vunpack.c.h.b16 %v129
  %v717 = vunpack.c.l.b16 %v130
  %v718 = vunpack.c.h.b16 %v130
  %v719 = vunpack.c.l.b16 %v131
  %v720 = vunpack.c.h.b16 %v131
  %v721 = vunpack.c.l.b16 %v132
  %v722 = vunpack.c.h.b16 %v132
  %v723 = vunpack.c.l.b16 %v133
  %v724 = vunpack.c.h.b16 %v133
  %v725 = vunpack.c.l.b16 %v134
  %v726 = vunpack.c.h.b16 %v134
  %v727 = vpack.c.b16 %v601, %v599
  %v728 = vpack.c.b16 %v602, %v600
  %v729 = vpack.c.b16 %v605, %v603
  %v730 = vpack.c.b16 %v606, %v604
  %v731 = vpack.c.b16 %v609, %v607
  %v732 = vpack.c.b16 %v610, %v608
  %v733 = vpack.c.b16 %v613, %v611
  %v734 = vpack.c.b16 %v614, %v612
  %v735 = vpack.c.b16 %v617, %v615
  %v736 = vpack.c.b16 %v618, %v616
  %v737 = vpack.c.b16 %v621, %v619
  %v738 = vpack.c.b16 %v622, %v620
  %v739 = vpack.c.b16 %v625, %v623
  %v740 = vpack.c.b16 %v626, %v624
  %v741 = vpack.c.b16 %v629, %v627
  %v742 = vpack.c.b16 %v630, %v628
  %v743 = vpack.c.b16 %v633, %v631
  %v744 = vpack.c.b16 %v634, %v632
  %v745 = vpack.c.b16 %v637, %v635
  %v746 = vpack.c.b16 %v638, %v636
  %v747 = vpack.c.b16 %v641, %v639
  %v748 = vpack.c.b16 %v642, %v640
  %v749 = vpack.c.b16 %v645, %v643
  %v750 = vpack.c.b16 %v646, %v644
  %v751 = vpack.c.b16 %v649, %v647
  %v752 = vpack.c.b16 %v650, %v648
  %v753 = vpack.c.b16 %v653, %v651
  %v754 = vpack.c.b16 %v654, %v652
  %v755 = vpack.c.b16 %v657, %v655
  %v756 = vpack.c.b16 %v658, %v656
  %v757 = vpack.c.b16 %v661, %v659
  %v758 = vpack.c.b16 %v662, %v660
  %v759 = vpack.c.b16 %v665, %v663
  %v760 = vpack.c.b16 %v666, %v664
  %v761 = vpack.c.b16 %v669, %v667
  %v762 = vpack.c.b16 %v670, %v668
  %v763 = vpack.c.b16 %v673, %v671
  %v764 = vpack.c.b16 %v674, %v672
  %v765 = vpack.c.b16 %v677, %v675
  %v766 = vpack.c.b16 %v678, %v676
  %v767 = vpack.c.b16 %v681, %v679
  %v768 = vpack.c.b16 %v682, %v680
  %v769 = vpack.c.b16 %v685, %v683
  %v770 = vpack.c.b16 %v686, %v684
  %v771 = vpack.c.b16 %v689, %v687
  %v772 = vpack.c.b16 %v690, %v688
  %v773 = vpack.c.b16 %v693, %v691
  %v774 = vpack.c.b16 %v694, %v692
  %v775 = vpack.c.b16 %v697, %v695
  %v776 = vpack.c.b16 %v698, %v696
  %v777 = vpack.c.b16 %v701, %v699
  %v778 = vpack.c.b16 %v702, %v700
  %v779 = vpack.c.b16 %v705, %v703
  %v780 = vpack.c.b16 %v706, %v704
  %v781 = vpack.c.b16 %v709, %v707
  %v782 = vpack.c.b16 %v710, %v708
  %v783 = vpack.c.b16 %v713, %v711
  %v784 = vpack.c.b16 %v714, %v712
  %v785 = vpack.c.b16 %v717, %v715
  %v786 = vpack.c.b16 %v718, %v716
  %v787 = vpack.c.b16 %v721, %v719
  %v788 = vpack.c.b16 %v722, %v720
  %v789 = vpack.c.b16 %v725, %v723
  %v790 = vpack.c.b16 %v726, %v724
  %855 = vmatprep.subr.bf16.mxu0 0
  %856 = vmatpush1.bf16.msra.mxu0 %v135
  %857 = vmatprep.subr.bf16.mxu0 0
  %858 = vmatpush1.bf16.msra.mxu0 %v136
  %859 = vmatprep.subr.bf16.mxu0 0
  %860 = vmatpush1.bf16.msra.mxu0 %v137
  %861 = vmatprep.subr.bf16.mxu0 0
  %862 = vmatpush1.bf16.msra.mxu0 %v138
  %863 = vmatprep.subr.bf16.mxu0 0
  %864 = vmatpush1.bf16.msra.mxu0 %v139
  %865 = vmatprep.subr.bf16.mxu0 0
  %866 = vmatpush1.bf16.msra.mxu0 %v140
  %867 = vmatprep.subr.bf16.mxu0 0
  %868 = vmatpush1.bf16.msra.mxu0 %v141
  %869 = vmatprep.subr.bf16.mxu0 0
  %870 = vmatpush1.bf16.msra.mxu0 %v142
  %871 = vmatprep.subr.bf16.mxu0 0
  %872 = vmatpush1.bf16.msra.mxu0 %v143
  %873 = vmatprep.subr.bf16.mxu0 0
  %874 = vmatpush1.bf16.msra.mxu0 %v144
  %875 = vmatprep.subr.bf16.mxu0 0
  %876 = vmatpush1.bf16.msra.mxu0 %v145
  %877 = vmatprep.subr.bf16.mxu0 0
  %878 = vmatpush1.bf16.msra.mxu0 %v146
  %879 = vmatprep.subr.bf16.mxu0 0
  %880 = vmatpush1.bf16.msra.mxu0 %v147
  %881 = vmatprep.subr.bf16.mxu0 0
  %882 = vmatpush1.bf16.msra.mxu0 %v148
  %883 = vmatprep.subr.bf16.mxu0 0
  %884 = vmatpush1.bf16.msra.mxu0 %v149
  %885 = vmatprep.subr.bf16.mxu0 0
  %886 = vmatpush1.bf16.msra.mxu0 %v150
  %887 = vmatprep.mubr.bf16.mxu0 %v728
  %888 = vmatmul.mubr.bf16.gmra.mrb[0].mxu0 %v727
  %v889 = vpop.f32.mrb[0].mxu0
  %v890 = vadd.f32 %v218, %v889
  %v891 = vpop.f32.mrb[0].mxu0
  %v892 = vpop.f32.mrb[0].mxu0
  %v893 = vadd.f32 %v223, %v892
  %v894 = vpop.f32.mrb[0].mxu0
  %895 = vmatprep.mubr.bf16.mxu0 %v730
  %896 = vmatmul.mubr.bf16.gmra.mrb[0].mxu0 %v729
  %v897 = vpop.f32.mrb[0].mxu0
  %v898 = vadd.f32 %v228, %v897
  %v899 = vpop.f32.mrb[0].mxu0
  %v900 = vpop.f32.mrb[0].mxu0
  %v901 = vadd.f32 %v233, %v900
  %v902 = vpop.f32.mrb[0].mxu0
  %903 = vmatprep.mubr.bf16.mxu0 %v732
  %904 = vmatmul.mubr.bf16.gmra.mrb[0].mxu0 %v731
  %v905 = vpop.f32.mrb[0].mxu0
  %v906 = vadd.f32 %v238, %v905
  %v907 = vpop.f32.mrb[0].mxu0
  %v908 = vpop.f32.mrb[0].mxu0
  %v909 = vadd.f32 %v243, %v908
  %v910 = vpop.f32.mrb[0].mxu0
  %911 = vmatprep.mubr.bf16.mxu0 %v734
  %912 = vmatmul.mubr.bf16.gmra.mrb[0].mxu0 %v733
  %v913 = vpop.f32.mrb[0].mxu0
  %v914 = vadd.f32 %v248, %v913
  %v915 = vpop.f32.mrb[0].mxu0
  %v916 = vpop.f32.mrb[0].mxu0
  %v917 = vadd.f32 %v253, %v916
  %v918 = vpop.f32.mrb[0].mxu0
  %919 = vmatprep.mubr.bf16.mxu0 %v736
  %920 = vmatmul.mubr.bf16.gmra.mrb[0].mxu0 %v735
  %v921 = vpop.f32.mrb[0].mxu0
  %v922 = vadd.f32 %v258, %v921
  %v923 = vpop.f32.mrb[0].mxu0
  %v924 = vpop.f32.mrb[0].mxu0
  %v925 = vadd.f32 %v263, %v924
  %v926 = vpop.f32.mrb[0].mxu0
  %927 = vmatprep.mubr.bf16.mxu0 %v738
  %928 = vmatmul.mubr.bf16.gmra.mrb[0].mxu0 %v737
  %v929 = vpop.f32.mrb[0].mxu0
  %v930 = vadd.f32 %v268, %v929
  %v931 = vpop.f32.mrb[0].mxu0
  %v932 = vpop.f32.mrb[0].mxu0
  %v933 = vadd.f32 %v273, %v932
  %v934 = vpop.f32.mrb[0].mxu0
  %935 = vmatprep.mubr.bf16.mxu0 %v740
  %936 = vmatmul.mubr.bf16.gmra.mrb[0].mxu0 %v739
  %v937 = vpop.f32.mrb[0].mxu0
  %v938 = vadd.f32 %v278, %v937
  %v939 = vpop.f32.mrb[0].mxu0
  %v940 = vpop.f32.mrb[0].mxu0
  %v941 = vadd.f32 %v283, %v940
  %v942 = vpop.f32.mrb[0].mxu0
  %943 = vmatprep.mubr.bf16.mxu0 %v742
  %944 = vmatmul.mubr.bf16.gmra.mrb[0].mxu0 %v741
  %v945 = vpop.f32.mrb[0].mxu0
  %v946 = vadd.f32 %v288, %v945
  %v947 = vpop.f32.mrb[0].mxu0
  %v948 = vpop.f32.mrb[0].mxu0
  %v949 = vadd.f32 %v293, %v948
  %v950 = vpop.f32.mrb[0].mxu0
  %951 = vmatprep.mubr.bf16.mxu0 %v744
  %952 = vmatmul.mubr.bf16.gmra.mrb[0].mxu0 %v743
  %v953 = vpop.f32.mrb[0].mxu0
  %v954 = vadd.f32 %v298, %v953
  %v955 = vpop.f32.mrb[0].mxu0
  %v956 = vpop.f32.mrb[0].mxu0
  %v957 = vadd.f32 %v303, %v956
  %v958 = vpop.f32.mrb[0].mxu0
  %959 = vmatprep.mubr.bf16.mxu0 %v746
  %960 = vmatmul.mubr.bf16.gmra.mrb[0].mxu0 %v745
  %v961 = vpop.f32.mrb[0].mxu0
  %v962 = vadd.f32 %v308, %v961
  %v963 = vpop.f32.mrb[0].mxu0
  %v964 = vpop.f32.mrb[0].mxu0
  %v965 = vadd.f32 %v313, %v964
  %v966 = vpop.f32.mrb[0].mxu0
  %967 = vmatprep.mubr.bf16.mxu0 %v748
  %968 = vmatmul.mubr.bf16.gmra.mrb[0].mxu0 %v747
  %v969 = vpop.f32.mrb[0].mxu0
  %v970 = vadd.f32 %v318, %v969
  %v971 = vpop.f32.mrb[0].mxu0
  %v972 = vpop.f32.mrb[0].mxu0
  %v973 = vadd.f32 %v323, %v972
  %v974 = vpop.f32.mrb[0].mxu0
  %975 = vmatprep.mubr.bf16.mxu0 %v750
  %976 = vmatmul.mubr.bf16.gmra.mrb[0].mxu0 %v749
  %v977 = vpop.f32.mrb[0].mxu0
  %v978 = vadd.f32 %v328, %v977
  %v979 = vpop.f32.mrb[0].mxu0
  %v980 = vpop.f32.mrb[0].mxu0
  %v981 = vadd.f32 %v333, %v980
  %v982 = vpop.f32.mrb[0].mxu0
  %983 = vmatprep.mubr.bf16.mxu0 %v752
  %984 = vmatmul.mubr.bf16.gmra.mrb[0].mxu0 %v751
  %v985 = vpop.f32.mrb[0].mxu0
  %v986 = vadd.f32 %v338, %v985
  %v987 = vpop.f32.mrb[0].mxu0
  %v988 = vpop.f32.mrb[0].mxu0
  %v989 = vadd.f32 %v343, %v988
  %v990 = vpop.f32.mrb[0].mxu0
  %991 = vmatprep.mubr.bf16.mxu0 %v754
  %992 = vmatmul.mubr.bf16.gmra.mrb[0].mxu0 %v753
  %v993 = vpop.f32.mrb[0].mxu0
  %v994 = vadd.f32 %v348, %v993
  %v995 = vpop.f32.mrb[0].mxu0
  %v996 = vpop.f32.mrb[0].mxu0
  %v997 = vadd.f32 %v353, %v996
  %v998 = vpop.f32.mrb[0].mxu0
  %999 = vmatprep.mubr.bf16.mxu0 %v756
  %1000 = vmatmul.mubr.bf16.gmra.mrb[0].mxu0 %v755
  %v1001 = vpop.f32.mrb[0].mxu0
  %v1002 = vadd.f32 %v358, %v1001
  %v1003 = vpop.f32.mrb[0].mxu0
  %v1004 = vpop.f32.mrb[0].mxu0
  %v1005 = vadd.f32 %v363, %v1004
  %v1006 = vpop.f32.mrb[0].mxu0
  %1007 = vmatprep.mubr.bf16.mxu0 %v758
  %1008 = vmatmul.mubr.bf16.gmra.mrb[0].mxu0 %v757
  %v1009 = vpop.f32.mrb[0].mxu0
  %v1010 = vadd.f32 %v368, %v1009
  %v1011 = vpop.f32.mrb[0].mxu0
  %v1012 = vpop.f32.mrb[0].mxu0
  %v1013 = vadd.f32 %v373, %v1012
  %v1014 = vpop.f32.mrb[0].mxu0
  %1015 = vmatprep.mubr.bf16.mxu0 %v760
  %1016 = vmatmul.mubr.bf16.gmra.mrb[0].mxu0 %v759
  %v1017 = vpop.f32.mrb[0].mxu0
  %v1018 = vadd.f32 %v378, %v1017
  %v1019 = vpop.f32.mrb[0].mxu0
  %v1020 = vpop.f32.mrb[0].mxu0
  %v1021 = vadd.f32 %v383, %v1020
  %v1022 = vpop.f32.mrb[0].mxu0
  %1023 = vmatprep.mubr.bf16.mxu0 %v762
  %1024 = vmatmul.mubr.bf16.gmra.mrb[0].mxu0 %v761
  %v1025 = vpop.f32.mrb[0].mxu0
  %v1026 = vadd.f32 %v388, %v1025
  %v1027 = vpop.f32.mrb[0].mxu0
  %v1028 = vpop.f32.mrb[0].mxu0
  %v1029 = vadd.f32 %v393, %v1028
  %v1030 = vpop.f32.mrb[0].mxu0
  %1031 = vmatprep.mubr.bf16.mxu0 %v764
  %1032 = vmatmul.mubr.bf16.gmra.mrb[0].mxu0 %v763
  %v1033 = vpop.f32.mrb[0].mxu0
  %v1034 = vadd.f32 %v398, %v1033
  %v1035 = vpop.f32.mrb[0].mxu0
  %v1036 = vpop.f32.mrb[0].mxu0
  %v1037 = vadd.f32 %v403, %v1036
  %v1038 = vpop.f32.mrb[0].mxu0
  %1039 = vmatprep.mubr.bf16.mxu0 %v766
  %1040 = vmatmul.mubr.bf16.gmra.mrb[0].mxu0 %v765
  %v1041 = vpop.f32.mrb[0].mxu0
  %v1042 = vadd.f32 %v408, %v1041
  %v1043 = vpop.f32.mrb[0].mxu0
  %v1044 = vpop.f32.mrb[0].mxu0
  %v1045 = vadd.f32 %v413, %v1044
  %v1046 = vpop.f32.mrb[0].mxu0
  %1047 = vmatprep.mubr.bf16.mxu0 %v768
  %1048 = vmatmul.mubr.bf16.gmra.mrb[0].mxu0 %v767
  %v1049 = vpop.f32.mrb[0].mxu0
  %v1050 = vadd.f32 %v418, %v1049
  %v1051 = vpop.f32.mrb[0].mxu0
  %v1052 = vpop.f32.mrb[0].mxu0
  %v1053 = vadd.f32 %v423, %v1052
  %v1054 = vpop.f32.mrb[0].mxu0
  %1055 = vmatprep.mubr.bf16.mxu0 %v770
  %1056 = vmatmul.mubr.bf16.gmra.mrb[0].mxu0 %v769
  %v1057 = vpop.f32.mrb[0].mxu0
  %v1058 = vadd.f32 %v428, %v1057
  %v1059 = vpop.f32.mrb[0].mxu0
  %v1060 = vpop.f32.mrb[0].mxu0
  %v1061 = vadd.f32 %v433, %v1060
  %v1062 = vpop.f32.mrb[0].mxu0
  %1063 = vmatprep.mubr.bf16.mxu0 %v772
  %1064 = vmatmul.mubr.bf16.gmra.mrb[0].mxu0 %v771
  %v1065 = vpop.f32.mrb[0].mxu0
  %v1066 = vadd.f32 %v438, %v1065
  %v1067 = vpop.f32.mrb[0].mxu0
  %v1068 = vpop.f32.mrb[0].mxu0
  %v1069 = vadd.f32 %v443, %v1068
  %v1070 = vpop.f32.mrb[0].mxu0
  %1071 = vmatprep.mubr.bf16.mxu0 %v774
  %1072 = vmatmul.mubr.bf16.gmra.mrb[0].mxu0 %v773
  %v1073 = vpop.f32.mrb[0].mxu0
  %v1074 = vadd.f32 %v448, %v1073
  %v1075 = vpop.f32.mrb[0].mxu0
  %v1076 = vpop.f32.mrb[0].mxu0
  %v1077 = vadd.f32 %v453, %v1076
  %v1078 = vpop.f32.mrb[0].mxu0
  %1079 = vmatprep.mubr.bf16.mxu0 %v776
  %1080 = vmatmul.mubr.bf16.gmra.mrb[0].mxu0 %v775
  %v1081 = vpop.f32.mrb[0].mxu0
  %v1082 = vadd.f32 %v458, %v1081
  %v1083 = vpop.f32.mrb[0].mxu0
  %v1084 = vpop.f32.mrb[0].mxu0
  %v1085 = vadd.f32 %v463, %v1084
  %v1086 = vpop.f32.mrb[0].mxu0
  %1087 = vmatprep.mubr.bf16.mxu0 %v778
  %1088 = vmatmul.mubr.bf16.gmra.mrb[0].mxu0 %v777
  %v1089 = vpop.f32.mrb[0].mxu0
  %v1090 = vadd.f32 %v468, %v1089
  %v1091 = vpop.f32.mrb[0].mxu0
  %v1092 = vpop.f32.mrb[0].mxu0
  %v1093 = vadd.f32 %v473, %v1092
  %v1094 = vpop.f32.mrb[0].mxu0
  %1095 = vmatprep.mubr.bf16.mxu0 %v780
  %1096 = vmatmul.mubr.bf16.gmra.mrb[0].mxu0 %v779
  %v1097 = vpop.f32.mrb[0].mxu0
  %v1098 = vadd.f32 %v478, %v1097
  %v1099 = vpop.f32.mrb[0].mxu0
  %v1100 = vpop.f32.mrb[0].mxu0
  %v1101 = vadd.f32 %v483, %v1100
  %v1102 = vpop.f32.mrb[0].mxu0
  %1103 = vmatprep.mubr.bf16.mxu0 %v782
  %1104 = vmatmul.mubr.bf16.gmra.mrb[0].mxu0 %v781
  %v1105 = vpop.f32.mrb[0].mxu0
  %v1106 = vadd.f32 %v488, %v1105
  %v1107 = vpop.f32.mrb[0].mxu0
  %v1108 = vpop.f32.mrb[0].mxu0
  %v1109 = vadd.f32 %v493, %v1108
  %v1110 = vpop.f32.mrb[0].mxu0
  %1111 = vmatprep.mubr.bf16.mxu0 %v784
  %1112 = vmatmul.mubr.bf16.gmra.mrb[0].mxu0 %v783
  %v1113 = vpop.f32.mrb[0].mxu0
  %v1114 = vadd.f32 %v498, %v1113
  %v1115 = vpop.f32.mrb[0].mxu0
  %v1116 = vpop.f32.mrb[0].mxu0
  %v1117 = vadd.f32 %v503, %v1116
  %v1118 = vpop.f32.mrb[0].mxu0
  %1119 = vmatprep.mubr.bf16.mxu0 %v786
  %1120 = vmatmul.mubr.bf16.gmra.mrb[0].mxu0 %v785
  %v1121 = vpop.f32.mrb[0].mxu0
  %v1122 = vadd.f32 %v508, %v1121
  %v1123 = vpop.f32.mrb[0].mxu0
  %v1124 = vpop.f32.mrb[0].mxu0
  %v1125 = vadd.f32 %v513, %v1124
  %v1126 = vpop.f32.mrb[0].mxu0
  %1127 = vmatprep.mubr.bf16.mxu0 %v788
  %1128 = vmatmul.mubr.bf16.gmra.mrb[0].mxu0 %v787
  %v1129 = vpop.f32.mrb[0].mxu0
  %v1130 = vadd.f32 %v518, %v1129
  %v1131 = vpop.f32.mrb[0].mxu0
  %v1132 = vpop.f32.mrb[0].mxu0
  %v1133 = vadd.f32 %v523, %v1132
  %v1134 = vpop.f32.mrb[0].mxu0
  %1135 = vmatprep.mubr.bf16.mxu0 %v790
  %1136 = vmatmul.mubr.bf16.gmra.mrb[0].mxu0 %v789
  %v1137 = vpop.f32.mrb[0].mxu0
  %v1138 = vadd.f32 %v528, %v1137
  %v1139 = vpop.f32.mrb[0].mxu0
  %v1140 = vpop.f32.mrb[0].mxu0
  %v1141 = vadd.f32 %v533, %v1140
  %v1142 = vpop.f32.mrb[0].mxu0
  %1143 = vdwg.mxu0
  %v1144 = vmul.f32 %v890, 0.5
  %v1145 = vmul.f32 %v893, 0.5
  %v1146 = vmul.f32 %v898, 0.5
  %v1147 = vmul.f32 %v901, 0.5
  %v1148 = vmul.f32 %v906, 0.5
  %v1149 = vmul.f32 %v909, 0.5
  %v1150 = vmul.f32 %v914, 0.5
  %v1151 = vmul.f32 %v917, 0.5
  %v1152 = vmul.f32 %v922, 0.5
  %v1153 = vmul.f32 %v925, 0.5
  %v1154 = vmul.f32 %v930, 0.5
  %v1155 = vmul.f32 %v933, 0.5
  %v1156 = vmul.f32 %v938, 0.5
  %v1157 = vmul.f32 %v941, 0.5
  %v1158 = vmul.f32 %v946, 0.5
  %v1159 = vmul.f32 %v949, 0.5
  %v1160 = vmul.f32 %v954, 0.5
  %v1161 = vmul.f32 %v957, 0.5
  %v1162 = vmul.f32 %v962, 0.5
  %v1163 = vmul.f32 %v965, 0.5
  %v1164 = vmul.f32 %v970, 0.5
  %v1165 = vmul.f32 %v973, 0.5
  %v1166 = vmul.f32 %v978, 0.5
  %v1167 = vmul.f32 %v981, 0.5
  %v1168 = vmul.f32 %v986, 0.5
  %v1169 = vmul.f32 %v989, 0.5
  %v1170 = vmul.f32 %v994, 0.5
  %v1171 = vmul.f32 %v997, 0.5
  %v1172 = vmul.f32 %v1002, 0.5
  %v1173 = vmul.f32 %v1005, 0.5
  %v1174 = vmul.f32 %v1010, 0.5
  %v1175 = vmul.f32 %v1013, 0.5
  %v1176 = vmul.f32 %v1018, 0.5
  %v1177 = vmul.f32 %v1021, 0.5
  %v1178 = vmul.f32 %v1026, 0.5
  %v1179 = vmul.f32 %v1029, 0.5
  %v1180 = vmul.f32 %v1034, 0.5
  %v1181 = vmul.f32 %v1037, 0.5
  %v1182 = vmul.f32 %v1042, 0.5
  %v1183 = vmul.f32 %v1045, 0.5
  %v1184 = vmul.f32 %v1050, 0.5
  %v1185 = vmul.f32 %v1053, 0.5
  %v1186 = vmul.f32 %v1058, 0.5
  %v1187 = vmul.f32 %v1061, 0.5
  %v1188 = vmul.f32 %v1066, 0.5
  %v1189 = vmul.f32 %v1069, 0.5
  %v1190 = vmul.f32 %v1074, 0.5
  %v1191 = vmul.f32 %v1077, 0.5
  %v1192 = vmul.f32 %v1082, 0.5
  %v1193 = vmul.f32 %v1085, 0.5
  %v1194 = vmul.f32 %v1090, 0.5
  %v1195 = vmul.f32 %v1093, 0.5
  %v1196 = vmul.f32 %v1098, 0.5
  %v1197 = vmul.f32 %v1101, 0.5
  %v1198 = vmul.f32 %v1106, 0.5
  %v1199 = vmul.f32 %v1109, 0.5
  %v1200 = vmul.f32 %v1114, 0.5
  %v1201 = vmul.f32 %v1117, 0.5
  %v1202 = vmul.f32 %v1122, 0.5
  %v1203 = vmul.f32 %v1125, 0.5
  %v1204 = vmul.f32 %v1130, 0.5
  %v1205 = vmul.f32 %v1133, 0.5
  %v1206 = vmul.f32 %v1138, 0.5
  %v1207 = vmul.f32 %v1141, 0.5
  %v1208 = vmul.f32 %v890, 0.70710677
  %v1209 = vmul.f32 %v893, 0.70710677
  %v1210 = vmul.f32 %v898, 0.70710677
  %v1211 = vmul.f32 %v901, 0.70710677
  %v1212 = vmul.f32 %v906, 0.70710677
  %v1213 = vmul.f32 %v909, 0.70710677
  %v1214 = vmul.f32 %v914, 0.70710677
  %v1215 = vmul.f32 %v917, 0.70710677
  %v1216 = vmul.f32 %v922, 0.70710677
  %v1217 = vmul.f32 %v925, 0.70710677
  %v1218 = vmul.f32 %v930, 0.70710677
  %v1219 = vmul.f32 %v933, 0.70710677
  %v1220 = vmul.f32 %v938, 0.70710677
  %v1221 = vmul.f32 %v941, 0.70710677
  %v1222 = vmul.f32 %v946, 0.70710677
  %v1223 = vmul.f32 %v949, 0.70710677
  %v1224 = vmul.f32 %v954, 0.70710677
  %v1225 = vmul.f32 %v957, 0.70710677
  %v1226 = vmul.f32 %v962, 0.70710677
  %v1227 = vmul.f32 %v965, 0.70710677
  %v1228 = vmul.f32 %v970, 0.70710677
  %v1229 = vmul.f32 %v973, 0.70710677
  %v1230 = vmul.f32 %v978, 0.70710677
  %v1231 = vmul.f32 %v981, 0.70710677
  %v1232 = vmul.f32 %v986, 0.70710677
  %v1233 = vmul.f32 %v989, 0.70710677
  %v1234 = vmul.f32 %v994, 0.70710677
  %v1235 = vmul.f32 %v997, 0.70710677
  %v1236 = vmul.f32 %v1002, 0.70710677
  %v1237 = vmul.f32 %v1005, 0.70710677
  %v1238 = vmul.f32 %v1010, 0.70710677
  %v1239 = vmul.f32 %v1013, 0.70710677
  %v1240 = vmul.f32 %v1018, 0.70710677
  %v1241 = vmul.f32 %v1021, 0.70710677
  %v1242 = vmul.f32 %v1026, 0.70710677
  %v1243 = vmul.f32 %v1029, 0.70710677
  %v1244 = vmul.f32 %v1034, 0.70710677
  %v1245 = vmul.f32 %v1037, 0.70710677
  %v1246 = vmul.f32 %v1042, 0.70710677
  %v1247 = vmul.f32 %v1045, 0.70710677
  %v1248 = vmul.f32 %v1050, 0.70710677
  %v1249 = vmul.f32 %v1053, 0.70710677
  %v1250 = vmul.f32 %v1058, 0.70710677
  %v1251 = vmul.f32 %v1061, 0.70710677
  %v1252 = vmul.f32 %v1066, 0.70710677
  %v1253 = vmul.f32 %v1069, 0.70710677
  %v1254 = vmul.f32 %v1074, 0.70710677
  %v1255 = vmul.f32 %v1077, 0.70710677
  %v1256 = vmul.f32 %v1082, 0.70710677
  %v1257 = vmul.f32 %v1085, 0.70710677
  %v1258 = vmul.f32 %v1090, 0.70710677
  %v1259 = vmul.f32 %v1093, 0.70710677
  %v1260 = vmul.f32 %v1098, 0.70710677
  %v1261 = vmul.f32 %v1101, 0.70710677
  %v1262 = vmul.f32 %v1106, 0.70710677
  %v1263 = vmul.f32 %v1109, 0.70710677
  %v1264 = vmul.f32 %v1114, 0.70710677
  %v1265 = vmul.f32 %v1117, 0.70710677
  %v1266 = vmul.f32 %v1122, 0.70710677
  %v1267 = vmul.f32 %v1125, 0.70710677
  %v1268 = vmul.f32 %v1130, 0.70710677
  %v1269 = vmul.f32 %v1133, 0.70710677
  %v1270 = vmul.f32 %v1138, 0.70710677
  %v1271 = vmul.f32 %v1141, 0.70710677
  %v1272 = verf.f32.pop %v1208
  %v1273 = verf.f32.pop %v1209
  %v1274 = verf.f32.pop %v1210
  %v1275 = verf.f32.pop %v1211
  %v1276 = verf.f32.pop %v1212
  %v1277 = verf.f32.pop %v1213
  %v1278 = verf.f32.pop %v1214
  %v1279 = verf.f32.pop %v1215
  %v1280 = verf.f32.pop %v1216
  %v1281 = verf.f32.pop %v1217
  %v1282 = verf.f32.pop %v1218
  %v1283 = verf.f32.pop %v1219
  %v1284 = verf.f32.pop %v1220
  %v1285 = verf.f32.pop %v1221
  %v1286 = verf.f32.pop %v1222
  %v1287 = verf.f32.pop %v1223
  %v1288 = verf.f32.pop %v1224
  %v1289 = verf.f32.pop %v1225
  %v1290 = verf.f32.pop %v1226
  %v1291 = verf.f32.pop %v1227
  %v1292 = verf.f32.pop %v1228
  %v1293 = verf.f32.pop %v1229
  %v1294 = verf.f32.pop %v1230
  %v1295 = verf.f32.pop %v1231
  %v1296 = verf.f32.pop %v1232
  %v1297 = verf.f32.pop %v1233
  %v1298 = verf.f32.pop %v1234
  %v1299 = verf.f32.pop %v1235
  %v1300 = verf.f32.pop %v1236
  %v1301 = verf.f32.pop %v1237
  %v1302 = verf.f32.pop %v1238
  %v1303 = verf.f32.pop %v1239
  %v1304 = verf.f32.pop %v1240
  %v1305 = verf.f32.pop %v1241
  %v1306 = verf.f32.pop %v1242
  %v1307 = verf.f32.pop %v1243
  %v1308 = verf.f32.pop %v1244
  %v1309 = verf.f32.pop %v1245
  %v1310 = verf.f32.pop %v1246
  %v1311 = verf.f32.pop %v1247
  %v1312 = verf.f32.pop %v1248
  %v1313 = verf.f32.pop %v1249
  %v1314 = verf.f32.pop %v1250
  %v1315 = verf.f32.pop %v1251
  %v1316 = verf.f32.pop %v1252
  %v1317 = verf.f32.pop %v1253
  %v1318 = verf.f32.pop %v1254
  %v1319 = verf.f32.pop %v1255
  %v1320 = verf.f32.pop %v1256
  %v1321 = verf.f32.pop %v1257
  %v1322 = verf.f32.pop %v1258
  %v1323 = verf.f32.pop %v1259
  %v1324 = verf.f32.pop %v1260
  %v1325 = verf.f32.pop %v1261
  %v1326 = verf.f32.pop %v1262
  %v1327 = verf.f32.pop %v1263
  %v1328 = verf.f32.pop %v1264
  %v1329 = verf.f32.pop %v1265
  %v1330 = verf.f32.pop %v1266
  %v1331 = verf.f32.pop %v1267
  %v1332 = verf.f32.pop %v1268
  %v1333 = verf.f32.pop %v1269
  %v1334 = verf.f32.pop %v1270
  %v1335 = verf.f32.pop %v1271
  %v1336 = vadd.f32 %v1272, 1.0
  %v1337 = vadd.f32 %v1273, 1.0
  %v1338 = vadd.f32 %v1274, 1.0
  %v1339 = vadd.f32 %v1275, 1.0
  %v1340 = vadd.f32 %v1276, 1.0
  %v1341 = vadd.f32 %v1277, 1.0
  %v1342 = vadd.f32 %v1278, 1.0
  %v1343 = vadd.f32 %v1279, 1.0
  %v1344 = vadd.f32 %v1280, 1.0
  %v1345 = vadd.f32 %v1281, 1.0
  %v1346 = vadd.f32 %v1282, 1.0
  %v1347 = vadd.f32 %v1283, 1.0
  %v1348 = vadd.f32 %v1284, 1.0
  %v1349 = vadd.f32 %v1285, 1.0
  %v1350 = vadd.f32 %v1286, 1.0
  %v1351 = vadd.f32 %v1287, 1.0
  %v1352 = vadd.f32 %v1288, 1.0
  %v1353 = vadd.f32 %v1289, 1.0
  %v1354 = vadd.f32 %v1290, 1.0
  %v1355 = vadd.f32 %v1291, 1.0
  %v1356 = vadd.f32 %v1292, 1.0
  %v1357 = vadd.f32 %v1293, 1.0
  %v1358 = vadd.f32 %v1294, 1.0
  %v1359 = vadd.f32 %v1295, 1.0
  %v1360 = vadd.f32 %v1296, 1.0
  %v1361 = vadd.f32 %v1297, 1.0
  %v1362 = vadd.f32 %v1298, 1.0
  %v1363 = vadd.f32 %v1299, 1.0
  %v1364 = vadd.f32 %v1300, 1.0
  %v1365 = vadd.f32 %v1301, 1.0
  %v1366 = vadd.f32 %v1302, 1.0
  %v1367 = vadd.f32 %v1303, 1.0
  %v1368 = vadd.f32 %v1304, 1.0
  %v1369 = vadd.f32 %v1305, 1.0
  %v1370 = vadd.f32 %v1306, 1.0
  %v1371 = vadd.f32 %v1307, 1.0
  %v1372 = vadd.f32 %v1308, 1.0
  %v1373 = vadd.f32 %v1309, 1.0
  %v1374 = vadd.f32 %v1310, 1.0
  %v1375 = vadd.f32 %v1311, 1.0
  %v1376 = vadd.f32 %v1312, 1.0
  %v1377 = vadd.f32 %v1313, 1.0
  %v1378 = vadd.f32 %v1314, 1.0
  %v1379 = vadd.f32 %v1315, 1.0
  %v1380 = vadd.f32 %v1316, 1.0
  %v1381 = vadd.f32 %v1317, 1.0
  %v1382 = vadd.f32 %v1318, 1.0
  %v1383 = vadd.f32 %v1319, 1.0
  %v1384 = vadd.f32 %v1320, 1.0
  %v1385 = vadd.f32 %v1321, 1.0
  %v1386 = vadd.f32 %v1322, 1.0
  %v1387 = vadd.f32 %v1323, 1.0
  %v1388 = vadd.f32 %v1324, 1.0
  %v1389 = vadd.f32 %v1325, 1.0
  %v1390 = vadd.f32 %v1326, 1.0
  %v1391 = vadd.f32 %v1327, 1.0
  %v1392 = vadd.f32 %v1328, 1.0
  %v1393 = vadd.f32 %v1329, 1.0
  %v1394 = vadd.f32 %v1330, 1.0
  %v1395 = vadd.f32 %v1331, 1.0
  %v1396 = vadd.f32 %v1332, 1.0
  %v1397 = vadd.f32 %v1333, 1.0
  %v1398 = vadd.f32 %v1334, 1.0
  %v1399 = vadd.f32 %v1335, 1.0
  %v1400 = vmul.f32 %v1144, %v1336
  %v1401 = vmul.f32 %v1145, %v1337
  %v1402 = vmul.f32 %v1146, %v1338
  %v1403 = vmul.f32 %v1147, %v1339
  %v1404 = vmul.f32 %v1148, %v1340
  %v1405 = vmul.f32 %v1149, %v1341
  %v1406 = vmul.f32 %v1150, %v1342
  %v1407 = vmul.f32 %v1151, %v1343
  %v1408 = vmul.f32 %v1152, %v1344
  %v1409 = vmul.f32 %v1153, %v1345
  %v1410 = vmul.f32 %v1154, %v1346
  %v1411 = vmul.f32 %v1155, %v1347
  %v1412 = vmul.f32 %v1156, %v1348
  %v1413 = vmul.f32 %v1157, %v1349
  %v1414 = vmul.f32 %v1158, %v1350
  %v1415 = vmul.f32 %v1159, %v1351
  %v1416 = vmul.f32 %v1160, %v1352
  %v1417 = vmul.f32 %v1161, %v1353
  %v1418 = vmul.f32 %v1162, %v1354
  %v1419 = vmul.f32 %v1163, %v1355
  %v1420 = vmul.f32 %v1164, %v1356
  %v1421 = vmul.f32 %v1165, %v1357
  %v1422 = vmul.f32 %v1166, %v1358
  %v1423 = vmul.f32 %v1167, %v1359
  %v1424 = vmul.f32 %v1168, %v1360
  %v1425 = vmul.f32 %v1169, %v1361
  %v1426 = vmul.f32 %v1170, %v1362
  %v1427 = vmul.f32 %v1171, %v1363
  %v1428 = vmul.f32 %v1172, %v1364
  %v1429 = vmul.f32 %v1173, %v1365
  %v1430 = vmul.f32 %v1174, %v1366
  %v1431 = vmul.f32 %v1175, %v1367
  %v1432 = vmul.f32 %v1176, %v1368
  %v1433 = vmul.f32 %v1177, %v1369
  %v1434 = vmul.f32 %v1178, %v1370
  %v1435 = vmul.f32 %v1179, %v1371
  %v1436 = vmul.f32 %v1180, %v1372
  %v1437 = vmul.f32 %v1181, %v1373
  %v1438 = vmul.f32 %v1182, %v1374
  %v1439 = vmul.f32 %v1183, %v1375
  %v1440 = vmul.f32 %v1184, %v1376
  %v1441 = vmul.f32 %v1185, %v1377
  %v1442 = vmul.f32 %v1186, %v1378
  %v1443 = vmul.f32 %v1187, %v1379
  %v1444 = vmul.f32 %v1188, %v1380
  %v1445 = vmul.f32 %v1189, %v1381
  %v1446 = vmul.f32 %v1190, %v1382
  %v1447 = vmul.f32 %v1191, %v1383
  %v1448 = vmul.f32 %v1192, %v1384
  %v1449 = vmul.f32 %v1193, %v1385
  %v1450 = vmul.f32 %v1194, %v1386
  %v1451 = vmul.f32 %v1195, %v1387
  %v1452 = vmul.f32 %v1196, %v1388
  %v1453 = vmul.f32 %v1197, %v1389
  %v1454 = vmul.f32 %v1198, %v1390
  %v1455 = vmul.f32 %v1199, %v1391
  %v1456 = vmul.f32 %v1200, %v1392
  %v1457 = vmul.f32 %v1201, %v1393
  %v1458 = vmul.f32 %v1202, %v1394
  %v1459 = vmul.f32 %v1203, %v1395
  %v1460 = vmul.f32 %v1204, %v1396
  %v1461 = vmul.f32 %v1205, %v1397
  %v1462 = vmul.f32 %v1206, %v1398
  %v1463 = vmul.f32 %v1207, %v1399
  %v1464 = vld [vmem:[%s3] sm:$0xff]
  %v1465 = vld [vmem:[%s3 + $0x8] sm:$0xff]
  %v1466 = vld [vmem:[%s3 + $0x10] sm:$0xff]
  %v1467 = vld [vmem:[%s3 + $0x18] sm:$0xff]
  %v1468 = vld [vmem:[%s3 + $0x20] sm:$0xff]
  %v1469 = vld [vmem:[%s3 + $0x28] sm:$0xff]
  %v1470 = vld [vmem:[%s3 + $0x30] sm:$0xff]
  %v1471 = vld [vmem:[%s3 + $0x38] sm:$0xff]
  %v1472 = vld [vmem:[%s3 + $0x40] sm:$0xff]
  %v1473 = vld [vmem:[%s3 + $0x48] sm:$0xff]
  %v1474 = vld [vmem:[%s3 + $0x50] sm:$0xff]
  %v1475 = vld [vmem:[%s3 + $0x58] sm:$0xff]
  %v1476 = vld [vmem:[%s3 + $0x60] sm:$0xff]
  %v1477 = vld [vmem:[%s3 + $0x68] sm:$0xff]
  %v1478 = vld [vmem:[%s3 + $0x70] sm:$0xff]
  %v1479 = vld [vmem:[%s3 + $0x78] sm:$0xff]
  %v1480 = vld [vmem:[%s3 + $0x80] sm:$0xff]
  %v1481 = vld [vmem:[%s3 + $0x88] sm:$0xff]
  %v1482 = vld [vmem:[%s3 + $0x90] sm:$0xff]
  %v1483 = vld [vmem:[%s3 + $0x98] sm:$0xff]
  %v1484 = vld [vmem:[%s3 + $0xa0] sm:$0xff]
  %v1485 = vld [vmem:[%s3 + $0xa8] sm:$0xff]
  %v1486 = vld [vmem:[%s3 + $0xb0] sm:$0xff]
  %v1487 = vld [vmem:[%s3 + $0xb8] sm:$0xff]
  %v1488 = vld [vmem:[%s3 + $0xc0] sm:$0xff]
  %v1489 = vld [vmem:[%s3 + $0xc8] sm:$0xff]
  %v1490 = vld [vmem:[%s3 + $0xd0] sm:$0xff]
  %v1491 = vld [vmem:[%s3 + $0xd8] sm:$0xff]
  %v1492 = vld [vmem:[%s3 + $0xe0] sm:$0xff]
  %v1493 = vld [vmem:[%s3 + $0xe8] sm:$0xff]
  %v1494 = vld [vmem:[%s3 + $0xf0] sm:$0xff]
  %v1495 = vld [vmem:[%s3 + $0xf8] sm:$0xff]
  %v1496 = vld [vmem:[%s3 + $0x100] sm:$0xff]
  %v1497 = vld [vmem:[%s3 + $0x108] sm:$0xff]
  %v1498 = vld [vmem:[%s3 + $0x110] sm:$0xff]
  %v1499 = vld [vmem:[%s3 + $0x118] sm:$0xff]
  %v1500 = vld [vmem:[%s3 + $0x120] sm:$0xff]
  %v1501 = vld [vmem:[%s3 + $0x128] sm:$0xff]
  %v1502 = vld [vmem:[%s3 + $0x130] sm:$0xff]
  %v1503 = vld [vmem:[%s3 + $0x138] sm:$0xff]
  %v1504 = vld [vmem:[%s3 + $0x140] sm:$0xff]
  %v1505 = vld [vmem:[%s3 + $0x148] sm:$0xff]
  %v1506 = vld [vmem:[%s3 + $0x150] sm:$0xff]
  %v1507 = vld [vmem:[%s3 + $0x158] sm:$0xff]
  %v1508 = vld [vmem:[%s3 + $0x160] sm:$0xff]
  %v1509 = vld [vmem:[%s3 + $0x168] sm:$0xff]
  %v1510 = vld [vmem:[%s3 + $0x170] sm:$0xff]
  %v1511 = vld [vmem:[%s3 + $0x178] sm:$0xff]
  %v1512 = vld [vmem:[%s3 + $0x180] sm:$0xff]
  %v1513 = vld [vmem:[%s3 + $0x188] sm:$0xff]
  %v1514 = vld [vmem:[%s3 + $0x190] sm:$0xff]
  %v1515 = vld [vmem:[%s3 + $0x198] sm:$0xff]
  %v1516 = vld [vmem:[%s3 + $0x1a0] sm:$0xff]
  %v1517 = vld [vmem:[%s3 + $0x1a8] sm:$0xff]
  %v1518 = vld [vmem:[%s3 + $0x1b0] sm:$0xff]
  %v1519 = vld [vmem:[%s3 + $0x1b8] sm:$0xff]
  %v1520 = vld [vmem:[%s3 + $0x1c0] sm:$0xff]
  %v1521 = vld [vmem:[%s3 + $0x1c8] sm:$0xff]
  %v1522 = vld [vmem:[%s3 + $0x1d0] sm:$0xff]
  %v1523 = vld [vmem:[%s3 + $0x1d8] sm:$0xff]
  %v1524 = vld [vmem:[%s3 + $0x1e0] sm:$0xff]
  %v1525 = vld [vmem:[%s3 + $0x1e8] sm:$0xff]
  %v1526 = vld [vmem:[%s3 + $0x1f0] sm:$0xff]
  %v1527 = vld [vmem:[%s3 + $0x1f8] sm:$0xff]
  %v1528 = vpack.c.bf16 %v1401, %v1400
  %v1529 = vpack.c.bf16 %v1403, %v1402
  %v1530 = vpack.c.bf16 %v1405, %v1404
  %v1531 = vpack.c.bf16 %v1407, %v1406
  %v1532 = vpack.c.bf16 %v1409, %v1408
  %v1533 = vpack.c.bf16 %v1411, %v1410
  %v1534 = vpack.c.bf16 %v1413, %v1412
  %v1535 = vpack.c.bf16 %v1415, %v1414
  %v1536 = vpack.c.bf16 %v1417, %v1416
  %v1537 = vpack.c.bf16 %v1419, %v1418
  %v1538 = vpack.c.bf16 %v1421, %v1420
  %v1539 = vpack.c.bf16 %v1423, %v1422
  %v1540 = vpack.c.bf16 %v1425, %v1424
  %v1541 = vpack.c.bf16 %v1427, %v1426
  %v1542 = vpack.c.bf16 %v1429, %v1428
  %v1543 = vpack.c.bf16 %v1431, %v1430
  %v1544 = vpack.c.bf16 %v1433, %v1432
  %v1545 = vpack.c.bf16 %v1435, %v1434
  %v1546 = vpack.c.bf16 %v1437, %v1436
  %v1547 = vpack.c.bf16 %v1439, %v1438
  %v1548 = vpack.c.bf16 %v1441, %v1440
  %v1549 = vpack.c.bf16 %v1443, %v1442
  %v1550 = vpack.c.bf16 %v1445, %v1444
  %v1551 = vpack.c.bf16 %v1447, %v1446
  %v1552 = vpack.c.bf16 %v1449, %v1448
  %v1553 = vpack.c.bf16 %v1451, %v1450
  %v1554 = vpack.c.bf16 %v1453, %v1452
  %v1555 = vpack.c.bf16 %v1455, %v1454
  %v1556 = vpack.c.bf16 %v1457, %v1456
  %v1557 = vpack.c.bf16 %v1459, %v1458
  %v1558 = vpack.c.bf16 %v1461, %v1460
  %v1559 = vpack.c.bf16 %v1463, %v1462
  %v1560 = vld [vmem:[%s4] sm:$0xff]
  %v1561 = vld [vmem:[%s4 + $0x8] sm:$0xff]
  %v1562 = vld [vmem:[%s4 + $0x10] sm:$0xff]
  %v1563 = vld [vmem:[%s4 + $0x18] sm:$0xff]
  %v1564 = vld [vmem:[%s4 + $0x20] sm:$0xff]
  %v1565 = vld [vmem:[%s4 + $0x28] sm:$0xff]
  %v1566 = vld [vmem:[%s4 + $0x30] sm:$0xff]
  %v1567 = vld [vmem:[%s4 + $0x38] sm:$0xff]
  %v1568 = vld [vmem:[%s4 + $0x40] sm:$0xff]
  %v1569 = vld [vmem:[%s4 + $0x48] sm:$0xff]
  %v1570 = vld [vmem:[%s4 + $0x50] sm:$0xff]
  %v1571 = vld [vmem:[%s4 + $0x58] sm:$0xff]
  %v1572 = vld [vmem:[%s4 + $0x60] sm:$0xff]
  %v1573 = vld [vmem:[%s4 + $0x68] sm:$0xff]
  %v1574 = vld [vmem:[%s4 + $0x70] sm:$0xff]
  %v1575 = vld [vmem:[%s4 + $0x78] sm:$0xff]
  %v1576 = vld [vmem:[%s4 + $0x80] sm:$0xff]
  %v1577 = vld [vmem:[%s4 + $0x88] sm:$0xff]
  %v1578 = vld [vmem:[%s4 + $0x90] sm:$0xff]
  %v1579 = vld [vmem:[%s4 + $0x98] sm:$0xff]
  %v1580 = vld [vmem:[%s4 + $0xa0] sm:$0xff]
  %v1581 = vld [vmem:[%s4 + $0xa8] sm:$0xff]
  %v1582 = vld [vmem:[%s4 + $0xb0] sm:$0xff]
  %v1583 = vld [vmem:[%s4 + $0xb8] sm:$0xff]
  %v1584 = vld [vmem:[%s4 + $0xc0] sm:$0xff]
  %v1585 = vld [vmem:[%s4 + $0xc8] sm:$0xff]
  %v1586 = vld [vmem:[%s4 + $0xd0] sm:$0xff]
  %v1587 = vld [vmem:[%s4 + $0xd8] sm:$0xff]
  %v1588 = vld [vmem:[%s4 + $0xe0] sm:$0xff]
  %v1589 = vld [vmem:[%s4 + $0xe8] sm:$0xff]
  %v1590 = vld [vmem:[%s4 + $0xf0] sm:$0xff]
  %v1591 = vld [vmem:[%s4 + $0xf8] sm:$0xff]
  %1593 = vset.pattern.permute.xlu0 0
  %1594 = vperm.xlu0 %1593, %v1560
  %v1595 = vpop.permute.xlu0 %1594
  %1598 = vset.pattern.permute.xlu0 0
  %1599 = vperm.xlu0 %1598, %v1561
  %v1600 = vpop.permute.xlu0 %1599
  %1603 = vset.pattern.permute.xlu0 0
  %1604 = vperm.xlu0 %1603, %v1562
  %v1605 = vpop.permute.xlu0 %1604
  %1608 = vset.pattern.permute.xlu0 0
  %1609 = vperm.xlu0 %1608, %v1563
  %v1610 = vpop.permute.xlu0 %1609
  %1613 = vset.pattern.permute.xlu0 0
  %1614 = vperm.xlu0 %1613, %v1564
  %v1615 = vpop.permute.xlu0 %1614
  %1618 = vset.pattern.permute.xlu0 0
  %1619 = vperm.xlu0 %1618, %v1565
  %v1620 = vpop.permute.xlu0 %1619
  %1623 = vset.pattern.permute.xlu0 0
  %1624 = vperm.xlu0 %1623, %v1566
  %v1625 = vpop.permute.xlu0 %1624
  %1628 = vset.pattern.permute.xlu0 0
  %1629 = vperm.xlu0 %1628, %v1567
  %v1630 = vpop.permute.xlu0 %1629
  %1633 = vset.pattern.permute.xlu0 0
  %1634 = vperm.xlu0 %1633, %v1568
  %v1635 = vpop.permute.xlu0 %1634
  %1638 = vset.pattern.permute.xlu0 0
  %1639 = vperm.xlu0 %1638, %v1569
  %v1640 = vpop.permute.xlu0 %1639
  %1643 = vset.pattern.permute.xlu0 0
  %1644 = vperm.xlu0 %1643, %v1570
  %v1645 = vpop.permute.xlu0 %1644
  %1648 = vset.pattern.permute.xlu0 0
  %1649 = vperm.xlu0 %1648, %v1571
  %v1650 = vpop.permute.xlu0 %1649
  %1653 = vset.pattern.permute.xlu0 0
  %1654 = vperm.xlu0 %1653, %v1572
  %v1655 = vpop.permute.xlu0 %1654
  %1658 = vset.pattern.permute.xlu0 0
  %1659 = vperm.xlu0 %1658, %v1573
  %v1660 = vpop.permute.xlu0 %1659
  %1663 = vset.pattern.permute.xlu0 0
  %1664 = vperm.xlu0 %1663, %v1574
  %v1665 = vpop.permute.xlu0 %1664
  %1668 = vset.pattern.permute.xlu0 0
  %1669 = vperm.xlu0 %1668, %v1575
  %v1670 = vpop.permute.xlu0 %1669
  %1673 = vset.pattern.permute.xlu0 0
  %1674 = vperm.xlu0 %1673, %v1576
  %v1675 = vpop.permute.xlu0 %1674
  %1678 = vset.pattern.permute.xlu0 0
  %1679 = vperm.xlu0 %1678, %v1577
  %v1680 = vpop.permute.xlu0 %1679
  %1683 = vset.pattern.permute.xlu0 0
  %1684 = vperm.xlu0 %1683, %v1578
  %v1685 = vpop.permute.xlu0 %1684
  %1688 = vset.pattern.permute.xlu0 0
  %1689 = vperm.xlu0 %1688, %v1579
  %v1690 = vpop.permute.xlu0 %1689
  %1693 = vset.pattern.permute.xlu0 0
  %1694 = vperm.xlu0 %1693, %v1580
  %v1695 = vpop.permute.xlu0 %1694
  %1698 = vset.pattern.permute.xlu0 0
  %1699 = vperm.xlu0 %1698, %v1581
  %v1700 = vpop.permute.xlu0 %1699
  %1703 = vset.pattern.permute.xlu0 0
  %1704 = vperm.xlu0 %1703, %v1582
  %v1705 = vpop.permute.xlu0 %1704
  %1708 = vset.pattern.permute.xlu0 0
  %1709 = vperm.xlu0 %1708, %v1583
  %v1710 = vpop.permute.xlu0 %1709
  %1713 = vset.pattern.permute.xlu0 0
  %1714 = vperm.xlu0 %1713, %v1584
  %v1715 = vpop.permute.xlu0 %1714
  %1718 = vset.pattern.permute.xlu0 0
  %1719 = vperm.xlu0 %1718, %v1585
  %v1720 = vpop.permute.xlu0 %1719
  %1723 = vset.pattern.permute.xlu0 0
  %1724 = vperm.xlu0 %1723, %v1586
  %v1725 = vpop.permute.xlu0 %1724
  %1728 = vset.pattern.permute.xlu0 0
  %1729 = vperm.xlu0 %1728, %v1587
  %v1730 = vpop.permute.xlu0 %1729
  %1733 = vset.pattern.permute.xlu0 0
  %1734 = vperm.xlu0 %1733, %v1588
  %v1735 = vpop.permute.xlu0 %1734
  %1738 = vset.pattern.permute.xlu0 0
  %1739 = vperm.xlu0 %1738, %v1589
  %v1740 = vpop.permute.xlu0 %1739
  %1743 = vset.pattern.permute.xlu0 0
  %1744 = vperm.xlu0 %1743, %v1590
  %v1745 = vpop.permute.xlu0 %1744
  %1748 = vset.pattern.permute.xlu0 0
  %1749 = vperm.xlu0 %1748, %v1591
  %v1750 = vpop.permute.xlu0 %1749
  %v1816 = vunpack.c.l.b16 %v1464
  %v1817 = vunpack.c.h.b16 %v1464
  %v1818 = vunpack.c.l.b16 %v1465
  %v1819 = vunpack.c.h.b16 %v1465
  %v1820 = vunpack.c.l.b16 %v1466
  %v1821 = vunpack.c.h.b16 %v1466
  %v1822 = vunpack.c.l.b16 %v1467
  %v1823 = vunpack.c.h.b16 %v1467
  %v1824 = vunpack.c.l.b16 %v1468
  %v1825 = vunpack.c.h.b16 %v1468
  %v1826 = vunpack.c.l.b16 %v1469
  %v1827 = vunpack.c.h.b16 %v1469
  %v1828 = vunpack.c.l.b16 %v1470
  %v1829 = vunpack.c.h.b16 %v1470
  %v1830 = vunpack.c.l.b16 %v1471
  %v1831 = vunpack.c.h.b16 %v1471
  %v1832 = vunpack.c.l.b16 %v1472
  %v1833 = vunpack.c.h.b16 %v1472
  %v1834 = vunpack.c.l.b16 %v1473
  %v1835 = vunpack.c.h.b16 %v1473
  %v1836 = vunpack.c.l.b16 %v1474
  %v1837 = vunpack.c.h.b16 %v1474
  %v1838 = vunpack.c.l.b16 %v1475
  %v1839 = vunpack.c.h.b16 %v1475
  %v1840 = vunpack.c.l.b16 %v1476
  %v1841 = vunpack.c.h.b16 %v1476
  %v1842 = vunpack.c.l.b16 %v1477
  %v1843 = vunpack.c.h.b16 %v1477
  %v1844 = vunpack.c.l.b16 %v1478
  %v1845 = vunpack.c.h.b16 %v1478
  %v1846 = vunpack.c.l.b16 %v1479
  %v1847 = vunpack.c.h.b16 %v1479
  %v1848 = vunpack.c.l.b16 %v1480
  %v1849 = vunpack.c.h.b16 %v1480
  %v1850 = vunpack.c.l.b16 %v1481
  %v1851 = vunpack.c.h.b16 %v1481
  %v1852 = vunpack.c.l.b16 %v1482
  %v1853 = vunpack.c.h.b16 %v1482
  %v1854 = vunpack.c.l.b16 %v1483
  %v1855 = vunpack.c.h.b16 %v1483
  %v1856 = vunpack.c.l.b16 %v1484
  %v1857 = vunpack.c.h.b16 %v1484
  %v1858 = vunpack.c.l.b16 %v1485
  %v1859 = vunpack.c.h.b16 %v1485
  %v1860 = vunpack.c.l.b16 %v1486
  %v1861 = vunpack.c.h.b16 %v1486
  %v1862 = vunpack.c.l.b16 %v1487
  %v1863 = vunpack.c.h.b16 %v1487
  %v1864 = vunpack.c.l.b16 %v1488
  %v1865 = vunpack.c.h.b16 %v1488
  %v1866 = vunpack.c.l.b16 %v1489
  %v1867 = vunpack.c.h.b16 %v1489
  %v1868 = vunpack.c.l.b16 %v1490
  %v1869 = vunpack.c.h.b16 %v1490
  %v1870 = vunpack.c.l.b16 %v1491
  %v1871 = vunpack.c.h.b16 %v1491
  %v1872 = vunpack.c.l.b16 %v1492
  %v1873 = vunpack.c.h.b16 %v1492
  %v1874 = vunpack.c.l.b16 %v1493
  %v1875 = vunpack.c.h.b16 %v1493
  %v1876 = vunpack.c.l.b16 %v1494
  %v1877 = vunpack.c.h.b16 %v1494
  %v1878 = vunpack.c.l.b16 %v1495
  %v1879 = vunpack.c.h.b16 %v1495
  %v1880 = vunpack.c.l.b16 %v1496
  %v1881 = vunpack.c.h.b16 %v1496
  %v1882 = vunpack.c.l.b16 %v1497
  %v1883 = vunpack.c.h.b16 %v1497
  %v1884 = vunpack.c.l.b16 %v1498
  %v1885 = vunpack.c.h.b16 %v1498
  %v1886 = vunpack.c.l.b16 %v1499
  %v1887 = vunpack.c.h.b16 %v1499
  %v1888 = vunpack.c.l.b16 %v1500
  %v1889 = vunpack.c.h.b16 %v1500
  %v1890 = vunpack.c.l.b16 %v1501
  %v1891 = vunpack.c.h.b16 %v1501
  %v1892 = vunpack.c.l.b16 %v1502
  %v1893 = vunpack.c.h.b16 %v1502
  %v1894 = vunpack.c.l.b16 %v1503
  %v1895 = vunpack.c.h.b16 %v1503
  %v1896 = vunpack.c.l.b16 %v1504
  %v1897 = vunpack.c.h.b16 %v1504
  %v1898 = vunpack.c.l.b16 %v1505
  %v1899 = vunpack.c.h.b16 %v1505
  %v1900 = vunpack.c.l.b16 %v1506
  %v1901 = vunpack.c.h.b16 %v1506
  %v1902 = vunpack.c.l.b16 %v1507
  %v1903 = vunpack.c.h.b16 %v1507
  %v1904 = vunpack.c.l.b16 %v1508
  %v1905 = vunpack.c.h.b16 %v1508
  %v1906 = vunpack.c.l.b16 %v1509
  %v1907 = vunpack.c.h.b16 %v1509
  %v1908 = vunpack.c.l.b16 %v1510
  %v1909 = vunpack.c.h.b16 %v1510
  %v1910 = vunpack.c.l.b16 %v1511
  %v1911 = vunpack.c.h.b16 %v1511
  %v1912 = vunpack.c.l.b16 %v1512
  %v1913 = vunpack.c.h.b16 %v1512
  %v1914 = vunpack.c.l.b16 %v1513
  %v1915 = vunpack.c.h.b16 %v1513
  %v1916 = vunpack.c.l.b16 %v1514
  %v1917 = vunpack.c.h.b16 %v1514
  %v1918 = vunpack.c.l.b16 %v1515
  %v1919 = vunpack.c.h.b16 %v1515
  %v1920 = vunpack.c.l.b16 %v1516
  %v1921 = vunpack.c.h.b16 %v1516
  %v1922 = vunpack.c.l.b16 %v1517
  %v1923 = vunpack.c.h.b16 %v1517
  %v1924 = vunpack.c.l.b16 %v1518
  %v1925 = vunpack.c.h.b16 %v1518
  %v1926 = vunpack.c.l.b16 %v1519
  %v1927 = vunpack.c.h.b16 %v1519
  %v1928 = vunpack.c.l.b16 %v1520
  %v1929 = vunpack.c.h.b16 %v1520
  %v1930 = vunpack.c.l.b16 %v1521
  %v1931 = vunpack.c.h.b16 %v1521
  %v1932 = vunpack.c.l.b16 %v1522
  %v1933 = vunpack.c.h.b16 %v1522
  %v1934 = vunpack.c.l.b16 %v1523
  %v1935 = vunpack.c.h.b16 %v1523
  %v1936 = vunpack.c.l.b16 %v1524
  %v1937 = vunpack.c.h.b16 %v1524
  %v1938 = vunpack.c.l.b16 %v1525
  %v1939 = vunpack.c.h.b16 %v1525
  %v1940 = vunpack.c.l.b16 %v1526
  %v1941 = vunpack.c.h.b16 %v1526
  %v1942 = vunpack.c.l.b16 %v1527
  %v1943 = vunpack.c.h.b16 %v1527
  %v1944 = vpack.c.b16 %v1820, %v1816
  %v1945 = vpack.c.b16 %v1821, %v1817
  %v1946 = vpack.c.b16 %v1822, %v1818
  %v1947 = vpack.c.b16 %v1823, %v1819
  %v1948 = vpack.c.b16 %v1828, %v1824
  %v1949 = vpack.c.b16 %v1829, %v1825
  %v1950 = vpack.c.b16 %v1830, %v1826
  %v1951 = vpack.c.b16 %v1831, %v1827
  %v1952 = vpack.c.b16 %v1836, %v1832
  %v1953 = vpack.c.b16 %v1837, %v1833
  %v1954 = vpack.c.b16 %v1838, %v1834
  %v1955 = vpack.c.b16 %v1839, %v1835
  %v1956 = vpack.c.b16 %v1844, %v1840
  %v1957 = vpack.c.b16 %v1845, %v1841
  %v1958 = vpack.c.b16 %v1846, %v1842
  %v1959 = vpack.c.b16 %v1847, %v1843
  %v1960 = vpack.c.b16 %v1852, %v1848
  %v1961 = vpack.c.b16 %v1853, %v1849
  %v1962 = vpack.c.b16 %v1854, %v1850
  %v1963 = vpack.c.b16 %v1855, %v1851
  %v1964 = vpack.c.b16 %v1860, %v1856
  %v1965 = vpack.c.b16 %v1861, %v1857
  %v1966 = vpack.c.b16 %v1862, %v1858
  %v1967 = vpack.c.b16 %v1863, %v1859
  %v1968 = vpack.c.b16 %v1868, %v1864
  %v1969 = vpack.c.b16 %v1869, %v1865
  %v1970 = vpack.c.b16 %v1870, %v1866
  %v1971 = vpack.c.b16 %v1871, %v1867
  %v1972 = vpack.c.b16 %v1876, %v1872
  %v1973 = vpack.c.b16 %v1877, %v1873
  %v1974 = vpack.c.b16 %v1878, %v1874
  %v1975 = vpack.c.b16 %v1879, %v1875
  %v1976 = vpack.c.b16 %v1884, %v1880
  %v1977 = vpack.c.b16 %v1885, %v1881
  %v1978 = vpack.c.b16 %v1886, %v1882
  %v1979 = vpack.c.b16 %v1887, %v1883
  %v1980 = vpack.c.b16 %v1892, %v1888
  %v1981 = vpack.c.b16 %v1893, %v1889
  %v1982 = vpack.c.b16 %v1894, %v1890
  %v1983 = vpack.c.b16 %v1895, %v1891
  %v1984 = vpack.c.b16 %v1900, %v1896
  %v1985 = vpack.c.b16 %v1901, %v1897
  %v1986 = vpack.c.b16 %v1902, %v1898
  %v1987 = vpack.c.b16 %v1903, %v1899
  %v1988 = vpack.c.b16 %v1908, %v1904
  %v1989 = vpack.c.b16 %v1909, %v1905
  %v1990 = vpack.c.b16 %v1910, %v1906
  %v1991 = vpack.c.b16 %v1911, %v1907
  %v1992 = vpack.c.b16 %v1916, %v1912
  %v1993 = vpack.c.b16 %v1917, %v1913
  %v1994 = vpack.c.b16 %v1918, %v1914
  %v1995 = vpack.c.b16 %v1919, %v1915
  %v1996 = vpack.c.b16 %v1924, %v1920
  %v1997 = vpack.c.b16 %v1925, %v1921
  %v1998 = vpack.c.b16 %v1926, %v1922
  %v1999 = vpack.c.b16 %v1927, %v1923
  %v2000 = vpack.c.b16 %v1932, %v1928
  %v2001 = vpack.c.b16 %v1933, %v1929
  %v2002 = vpack.c.b16 %v1934, %v1930
  %v2003 = vpack.c.b16 %v1935, %v1931
  %v2004 = vpack.c.b16 %v1940, %v1936
  %v2005 = vpack.c.b16 %v1941, %v1937
  %v2006 = vpack.c.b16 %v1942, %v1938
  %v2007 = vpack.c.b16 %v1943, %v1939
  %2072 = vmatprep.subr.bf16.mxu0 0
  %2073 = vmatpush1.bf16.msra.mxu0 %v1528
  %2074 = vmatprep.subr.bf16.mxu0 0
  %2075 = vmatpush1.bf16.msra.mxu0 %v1529
  %2076 = vmatprep.subr.bf16.mxu0 0
  %2077 = vmatpush1.bf16.msra.mxu0 %v1530
  %2078 = vmatprep.subr.bf16.mxu0 0
  %2079 = vmatpush1.bf16.msra.mxu0 %v1531
  %2080 = vmatprep.subr.bf16.mxu0 0
  %2081 = vmatpush1.bf16.msra.mxu0 %v1532
  %2082 = vmatprep.subr.bf16.mxu0 0
  %2083 = vmatpush1.bf16.msra.mxu0 %v1533
  %2084 = vmatprep.subr.bf16.mxu0 0
  %2085 = vmatpush1.bf16.msra.mxu0 %v1534
  %2086 = vmatprep.subr.bf16.mxu0 0
  %2087 = vmatpush1.bf16.msra.mxu0 %v1535
  %2088 = vmatprep.subr.bf16.mxu0 0
  %2089 = vmatpush1.bf16.msra.mxu0 %v1536
  %2090 = vmatprep.subr.bf16.mxu0 0
  %2091 = vmatpush1.bf16.msra.mxu0 %v1537
  %2092 = vmatprep.subr.bf16.mxu0 0
  %2093 = vmatpush1.bf16.msra.mxu0 %v1538
  %2094 = vmatprep.subr.bf16.mxu0 0
  %2095 = vmatpush1.bf16.msra.mxu0 %v1539
  %2096 = vmatprep.subr.bf16.mxu0 0
  %2097 = vmatpush1.bf16.msra.mxu0 %v1540
  %2098 = vmatprep.subr.bf16.mxu0 0
  %2099 = vmatpush1.bf16.msra.mxu0 %v1541
  %2100 = vmatprep.subr.bf16.mxu0 0
  %2101 = vmatpush1.bf16.msra.mxu0 %v1542
  %2102 = vmatprep.subr.bf16.mxu0 0
  %2103 = vmatpush1.bf16.msra.mxu0 %v1543
  %2104 = vmatprep.mubr.bf16.mxu0 %v1945
  %2105 = vmatmul.mubr.bf16.gmra.mrb[0].mxu0 %v1944
  %v2106 = vpop.f32.mrb[0].mxu0
  %v2107 = vadd.f32 %v1595, %v2106
  %v2108 = vpop.f32.mrb[0].mxu0
  %v2109 = vpop.f32.mrb[0].mxu0
  %v2110 = vadd.f32 %v1600, %v2109
  %v2111 = vpop.f32.mrb[0].mxu0
  %2112 = vmatprep.mubr.bf16.mxu0 %v1949
  %2113 = vmatmul.mubr.bf16.gmra.mrb[0].mxu0 %v1948
  %v2114 = vpop.f32.mrb[0].mxu0
  %v2115 = vadd.f32 %v1605, %v2114
  %v2116 = vpop.f32.mrb[0].mxu0
  %v2117 = vpop.f32.mrb[0].mxu0
  %v2118 = vadd.f32 %v1610, %v2117
  %v2119 = vpop.f32.mrb[0].mxu0
  %2120 = vmatprep.mubr.bf16.mxu0 %v1953
  %2121 = vmatmul.mubr.bf16.gmra.mrb[0].mxu0 %v1952
  %v2122 = vpop.f32.mrb[0].mxu0
  %v2123 = vadd.f32 %v1615, %v2122
  %v2124 = vpop.f32.mrb[0].mxu0
  %v2125 = vpop.f32.mrb[0].mxu0
  %v2126 = vadd.f32 %v1620, %v2125
  %v2127 = vpop.f32.mrb[0].mxu0
  %2128 = vmatprep.mubr.bf16.mxu0 %v1957
  %2129 = vmatmul.mubr.bf16.gmra.mrb[0].mxu0 %v1956
  %v2130 = vpop.f32.mrb[0].mxu0
  %v2131 = vadd.f32 %v1625, %v2130
  %v2132 = vpop.f32.mrb[0].mxu0
  %v2133 = vpop.f32.mrb[0].mxu0
  %v2134 = vadd.f32 %v1630, %v2133
  %v2135 = vpop.f32.mrb[0].mxu0
  %2136 = vmatprep.mubr.bf16.mxu0 %v1961
  %2137 = vmatmul.mubr.bf16.gmra.mrb[0].mxu0 %v1960
  %v2138 = vpop.f32.mrb[0].mxu0
  %v2139 = vadd.f32 %v1635, %v2138
  %v2140 = vpop.f32.mrb[0].mxu0
  %v2141 = vpop.f32.mrb[0].mxu0
  %v2142 = vadd.f32 %v1640, %v2141
  %v2143 = vpop.f32.mrb[0].mxu0
  %2144 = vmatprep.mubr.bf16.mxu0 %v1965
  %2145 = vmatmul.mubr.bf16.gmra.mrb[0].mxu0 %v1964
  %v2146 = vpop.f32.mrb[0].mxu0
  %v2147 = vadd.f32 %v1645, %v2146
  %v2148 = vpop.f32.mrb[0].mxu0
  %v2149 = vpop.f32.mrb[0].mxu0
  %v2150 = vadd.f32 %v1650, %v2149
  %v2151 = vpop.f32.mrb[0].mxu0
  %2152 = vmatprep.mubr.bf16.mxu0 %v1969
  %2153 = vmatmul.mubr.bf16.gmra.mrb[0].mxu0 %v1968
  %v2154 = vpop.f32.mrb[0].mxu0
  %v2155 = vadd.f32 %v1655, %v2154
  %v2156 = vpop.f32.mrb[0].mxu0
  %v2157 = vpop.f32.mrb[0].mxu0
  %v2158 = vadd.f32 %v1660, %v2157
  %v2159 = vpop.f32.mrb[0].mxu0
  %2160 = vmatprep.mubr.bf16.mxu0 %v1973
  %2161 = vmatmul.mubr.bf16.gmra.mrb[0].mxu0 %v1972
  %v2162 = vpop.f32.mrb[0].mxu0
  %v2163 = vadd.f32 %v1665, %v2162
  %v2164 = vpop.f32.mrb[0].mxu0
  %v2165 = vpop.f32.mrb[0].mxu0
  %v2166 = vadd.f32 %v1670, %v2165
  %v2167 = vpop.f32.mrb[0].mxu0
  %2168 = vmatprep.mubr.bf16.mxu0 %v1977
  %2169 = vmatmul.mubr.bf16.gmra.mrb[0].mxu0 %v1976
  %v2170 = vpop.f32.mrb[0].mxu0
  %v2171 = vadd.f32 %v1675, %v2170
  %v2172 = vpop.f32.mrb[0].mxu0
  %v2173 = vpop.f32.mrb[0].mxu0
  %v2174 = vadd.f32 %v1680, %v2173
  %v2175 = vpop.f32.mrb[0].mxu0
  %2176 = vmatprep.mubr.bf16.mxu0 %v1981
  %2177 = vmatmul.mubr.bf16.gmra.mrb[0].mxu0 %v1980
  %v2178 = vpop.f32.mrb[0].mxu0
  %v2179 = vadd.f32 %v1685, %v2178
  %v2180 = vpop.f32.mrb[0].mxu0
  %v2181 = vpop.f32.mrb[0].mxu0
  %v2182 = vadd.f32 %v1690, %v2181
  %v2183 = vpop.f32.mrb[0].mxu0
  %2184 = vmatprep.mubr.bf16.mxu0 %v1985
  %2185 = vmatmul.mubr.bf16.gmra.mrb[0].mxu0 %v1984
  %v2186 = vpop.f32.mrb[0].mxu0
  %v2187 = vadd.f32 %v1695, %v2186
  %v2188 = vpop.f32.mrb[0].mxu0
  %v2189 = vpop.f32.mrb[0].mxu0
  %v2190 = vadd.f32 %v1700, %v2189
  %v2191 = vpop.f32.mrb[0].mxu0
  %2192 = vmatprep.mubr.bf16.mxu0 %v1989
  %2193 = vmatmul.mubr.bf16.gmra.mrb[0].mxu0 %v1988
  %v2194 = vpop.f32.mrb[0].mxu0
  %v2195 = vadd.f32 %v1705, %v2194
  %v2196 = vpop.f32.mrb[0].mxu0
  %v2197 = vpop.f32.mrb[0].mxu0
  %v2198 = vadd.f32 %v1710, %v2197
  %v2199 = vpop.f32.mrb[0].mxu0
  %2200 = vmatprep.mubr.bf16.mxu0 %v1993
  %2201 = vmatmul.mubr.bf16.gmra.mrb[0].mxu0 %v1992
  %v2202 = vpop.f32.mrb[0].mxu0
  %v2203 = vadd.f32 %v1715, %v2202
  %v2204 = vpop.f32.mrb[0].mxu0
  %v2205 = vpop.f32.mrb[0].mxu0
  %v2206 = vadd.f32 %v1720, %v2205
  %v2207 = vpop.f32.mrb[0].mxu0
  %2208 = vmatprep.mubr.bf16.mxu0 %v1997
  %2209 = vmatmul.mubr.bf16.gmra.mrb[0].mxu0 %v1996
  %v2210 = vpop.f32.mrb[0].mxu0
  %v2211 = vadd.f32 %v1725, %v2210
  %v2212 = vpop.f32.mrb[0].mxu0
  %v2213 = vpop.f32.mrb[0].mxu0
  %v2214 = vadd.f32 %v1730, %v2213
  %v2215 = vpop.f32.mrb[0].mxu0
  %2216 = vmatprep.mubr.bf16.mxu0 %v2001
  %2217 = vmatmul.mubr.bf16.gmra.mrb[0].mxu0 %v2000
  %v2218 = vpop.f32.mrb[0].mxu0
  %v2219 = vadd.f32 %v1735, %v2218
  %v2220 = vpop.f32.mrb[0].mxu0
  %v2221 = vpop.f32.mrb[0].mxu0
  %v2222 = vadd.f32 %v1740, %v2221
  %v2223 = vpop.f32.mrb[0].mxu0
  %2224 = vmatprep.mubr.bf16.mxu0 %v2005
  %2225 = vmatmul.mubr.bf16.gmra.mrb[0].mxu0 %v2004
  %v2226 = vpop.f32.mrb[0].mxu0
  %v2227 = vadd.f32 %v1745, %v2226
  %v2228 = vpop.f32.mrb[0].mxu0
  %v2229 = vpop.f32.mrb[0].mxu0
  %v2230 = vadd.f32 %v1750, %v2229
  %v2231 = vpop.f32.mrb[0].mxu0
  %2232 = vdwg.mxu0
  %2233 = vmatprep.subr.bf16.mxu0 0
  %2234 = vmatpush1.bf16.msra.mxu0 %v1544
  %2235 = vmatprep.subr.bf16.mxu0 0
  %2236 = vmatpush1.bf16.msra.mxu0 %v1545
  %2237 = vmatprep.subr.bf16.mxu0 0
  %2238 = vmatpush1.bf16.msra.mxu0 %v1546
  %2239 = vmatprep.subr.bf16.mxu0 0
  %2240 = vmatpush1.bf16.msra.mxu0 %v1547
  %2241 = vmatprep.subr.bf16.mxu0 0
  %2242 = vmatpush1.bf16.msra.mxu0 %v1548
  %2243 = vmatprep.subr.bf16.mxu0 0
  %2244 = vmatpush1.bf16.msra.mxu0 %v1549
  %2245 = vmatprep.subr.bf16.mxu0 0
  %2246 = vmatpush1.bf16.msra.mxu0 %v1550
  %2247 = vmatprep.subr.bf16.mxu0 0
  %2248 = vmatpush1.bf16.msra.mxu0 %v1551
  %2249 = vmatprep.subr.bf16.mxu0 0
  %2250 = vmatpush1.bf16.msra.mxu0 %v1552
  %2251 = vmatprep.subr.bf16.mxu0 0
  %2252 = vmatpush1.bf16.msra.mxu0 %v1553
  %2253 = vmatprep.subr.bf16.mxu0 0
  %2254 = vmatpush1.bf16.msra.mxu0 %v1554
  %2255 = vmatprep.subr.bf16.mxu0 0
  %2256 = vmatpush1.bf16.msra.mxu0 %v1555
  %2257 = vmatprep.subr.bf16.mxu0 0
  %2258 = vmatpush1.bf16.msra.mxu0 %v1556
  %2259 = vmatprep.subr.bf16.mxu0 0
  %2260 = vmatpush1.bf16.msra.mxu0 %v1557
  %2261 = vmatprep.subr.bf16.mxu0 0
  %2262 = vmatpush1.bf16.msra.mxu0 %v1558
  %2263 = vmatprep.subr.bf16.mxu0 0
  %2264 = vmatpush1.bf16.msra.mxu0 %v1559
  %2265 = vmatprep.mubr.bf16.mxu0 %v1947
  %2266 = vmatmul.mubr.bf16.gmra.mrb[0].mxu0 %v1946
  %v2267 = vpop.f32.mrb[0].mxu0
  %v2268 = vadd.f32 %v2107, %v2267
  %v2269 = vpop.f32.mrb[0].mxu0
  %v2270 = vpop.f32.mrb[0].mxu0
  %v2271 = vadd.f32 %v2110, %v2270
  %v2272 = vpop.f32.mrb[0].mxu0
  %2273 = vmatprep.mubr.bf16.mxu0 %v1951
  %2274 = vmatmul.mubr.bf16.gmra.mrb[0].mxu0 %v1950
  %v2275 = vpop.f32.mrb[0].mxu0
  %v2276 = vadd.f32 %v2115, %v2275
  %v2277 = vpop.f32.mrb[0].mxu0
  %v2278 = vpop.f32.mrb[0].mxu0
  %v2279 = vadd.f32 %v2118, %v2278
  %v2280 = vpop.f32.mrb[0].mxu0
  %2281 = vmatprep.mubr.bf16.mxu0 %v1955
  %2282 = vmatmul.mubr.bf16.gmra.mrb[0].mxu0 %v1954
  %v2283 = vpop.f32.mrb[0].mxu0
  %v2284 = vadd.f32 %v2123, %v2283
  %v2285 = vpop.f32.mrb[0].mxu0
  %v2286 = vpop.f32.mrb[0].mxu0
  %v2287 = vadd.f32 %v2126, %v2286
  %v2288 = vpop.f32.mrb[0].mxu0
  %2289 = vmatprep.mubr.bf16.mxu0 %v1959
  %2290 = vmatmul.mubr.bf16.gmra.mrb[0].mxu0 %v1958
  %v2291 = vpop.f32.mrb[0].mxu0
  %v2292 = vadd.f32 %v2131, %v2291
  %v2293 = vpop.f32.mrb[0].mxu0
  %v2294 = vpop.f32.mrb[0].mxu0
  %v2295 = vadd.f32 %v2134, %v2294
  %v2296 = vpop.f32.mrb[0].mxu0
  %2297 = vmatprep.mubr.bf16.mxu0 %v1963
  %2298 = vmatmul.mubr.bf16.gmra.mrb[0].mxu0 %v1962
  %v2299 = vpop.f32.mrb[0].mxu0
  %v2300 = vadd.f32 %v2139, %v2299
  %v2301 = vpop.f32.mrb[0].mxu0
  %v2302 = vpop.f32.mrb[0].mxu0
  %v2303 = vadd.f32 %v2142, %v2302
  %v2304 = vpop.f32.mrb[0].mxu0
  %2305 = vmatprep.mubr.bf16.mxu0 %v1967
  %2306 = vmatmul.mubr.bf16.gmra.mrb[0].mxu0 %v1966
  %v2307 = vpop.f32.mrb[0].mxu0
  %v2308 = vadd.f32 %v2147, %v2307
  %v2309 = vpop.f32.mrb[0].mxu0
  %v2310 = vpop.f32.mrb[0].mxu0
  %v2311 = vadd.f32 %v2150, %v2310
  %v2312 = vpop.f32.mrb[0].mxu0
  %2313 = vmatprep.mubr.bf16.mxu0 %v1971
  %2314 = vmatmul.mubr.bf16.gmra.mrb[0].mxu0 %v1970
  %v2315 = vpop.f32.mrb[0].mxu0
  %v2316 = vadd.f32 %v2155, %v2315
  %v2317 = vpop.f32.mrb[0].mxu0
  %v2318 = vpop.f32.mrb[0].mxu0
  %v2319 = vadd.f32 %v2158, %v2318
  %v2320 = vpop.f32.mrb[0].mxu0
  %2321 = vmatprep.mubr.bf16.mxu0 %v1975
  %2322 = vmatmul.mubr.bf16.gmra.mrb[0].mxu0 %v1974
  %v2323 = vpop.f32.mrb[0].mxu0
  %v2324 = vadd.f32 %v2163, %v2323
  %v2325 = vpop.f32.mrb[0].mxu0
  %v2326 = vpop.f32.mrb[0].mxu0
  %v2327 = vadd.f32 %v2166, %v2326
  %v2328 = vpop.f32.mrb[0].mxu0
  %2329 = vmatprep.mubr.bf16.mxu0 %v1979
  %2330 = vmatmul.mubr.bf16.gmra.mrb[0].mxu0 %v1978
  %v2331 = vpop.f32.mrb[0].mxu0
  %v2332 = vadd.f32 %v2171, %v2331
  %v2333 = vpop.f32.mrb[0].mxu0
  %v2334 = vpop.f32.mrb[0].mxu0
  %v2335 = vadd.f32 %v2174, %v2334
  %v2336 = vpop.f32.mrb[0].mxu0
  %2337 = vmatprep.mubr.bf16.mxu0 %v1983
  %2338 = vmatmul.mubr.bf16.gmra.mrb[0].mxu0 %v1982
  %v2339 = vpop.f32.mrb[0].mxu0
  %v2340 = vadd.f32 %v2179, %v2339
  %v2341 = vpop.f32.mrb[0].mxu0
  %v2342 = vpop.f32.mrb[0].mxu0
  %v2343 = vadd.f32 %v2182, %v2342
  %v2344 = vpop.f32.mrb[0].mxu0
  %2345 = vmatprep.mubr.bf16.mxu0 %v1987
  %2346 = vmatmul.mubr.bf16.gmra.mrb[0].mxu0 %v1986
  %v2347 = vpop.f32.mrb[0].mxu0
  %v2348 = vadd.f32 %v2187, %v2347
  %v2349 = vpop.f32.mrb[0].mxu0
  %v2350 = vpop.f32.mrb[0].mxu0
  %v2351 = vadd.f32 %v2190, %v2350
  %v2352 = vpop.f32.mrb[0].mxu0
  %2353 = vmatprep.mubr.bf16.mxu0 %v1991
  %2354 = vmatmul.mubr.bf16.gmra.mrb[0].mxu0 %v1990
  %v2355 = vpop.f32.mrb[0].mxu0
  %v2356 = vadd.f32 %v2195, %v2355
  %v2357 = vpop.f32.mrb[0].mxu0
  %v2358 = vpop.f32.mrb[0].mxu0
  %v2359 = vadd.f32 %v2198, %v2358
  %v2360 = vpop.f32.mrb[0].mxu0
  %2361 = vmatprep.mubr.bf16.mxu0 %v1995
  %2362 = vmatmul.mubr.bf16.gmra.mrb[0].mxu0 %v1994
  %v2363 = vpop.f32.mrb[0].mxu0
  %v2364 = vadd.f32 %v2203, %v2363
  %v2365 = vpop.f32.mrb[0].mxu0
  %v2366 = vpop.f32.mrb[0].mxu0
  %v2367 = vadd.f32 %v2206, %v2366
  %v2368 = vpop.f32.mrb[0].mxu0
  %2369 = vmatprep.mubr.bf16.mxu0 %v1999
  %2370 = vmatmul.mubr.bf16.gmra.mrb[0].mxu0 %v1998
  %v2371 = vpop.f32.mrb[0].mxu0
  %v2372 = vadd.f32 %v2211, %v2371
  %v2373 = vpop.f32.mrb[0].mxu0
  %v2374 = vpop.f32.mrb[0].mxu0
  %v2375 = vadd.f32 %v2214, %v2374
  %v2376 = vpop.f32.mrb[0].mxu0
  %2377 = vmatprep.mubr.bf16.mxu0 %v2003
  %2378 = vmatmul.mubr.bf16.gmra.mrb[0].mxu0 %v2002
  %v2379 = vpop.f32.mrb[0].mxu0
  %v2380 = vadd.f32 %v2219, %v2379
  %v2381 = vpop.f32.mrb[0].mxu0
  %v2382 = vpop.f32.mrb[0].mxu0
  %v2383 = vadd.f32 %v2222, %v2382
  %v2384 = vpop.f32.mrb[0].mxu0
  %2385 = vmatprep.mubr.bf16.mxu0 %v2007
  %2386 = vmatmul.mubr.bf16.gmra.mrb[0].mxu0 %v2006
  %v2387 = vpop.f32.mrb[0].mxu0
  %v2388 = vadd.f32 %v2227, %v2387
  %v2389 = vpop.f32.mrb[0].mxu0
  %v2390 = vpop.f32.mrb[0].mxu0
  %v2391 = vadd.f32 %v2230, %v2390
  %v2392 = vpop.f32.mrb[0].mxu0
  %2393 = vdwg.mxu0
  %v2394 = vmul.f32 %v2268, 0.5
  %v2395 = vmul.f32 %v2271, 0.5
  %v2396 = vmul.f32 %v2276, 0.5
  %v2397 = vmul.f32 %v2279, 0.5
  %v2398 = vmul.f32 %v2284, 0.5
  %v2399 = vmul.f32 %v2287, 0.5
  %v2400 = vmul.f32 %v2292, 0.5
  %v2401 = vmul.f32 %v2295, 0.5
  %v2402 = vmul.f32 %v2300, 0.5
  %v2403 = vmul.f32 %v2303, 0.5
  %v2404 = vmul.f32 %v2308, 0.5
  %v2405 = vmul.f32 %v2311, 0.5
  %v2406 = vmul.f32 %v2316, 0.5
  %v2407 = vmul.f32 %v2319, 0.5
  %v2408 = vmul.f32 %v2324, 0.5
  %v2409 = vmul.f32 %v2327, 0.5
  %v2410 = vmul.f32 %v2332, 0.5
  %v2411 = vmul.f32 %v2335, 0.5
  %v2412 = vmul.f32 %v2340, 0.5
  %v2413 = vmul.f32 %v2343, 0.5
  %v2414 = vmul.f32 %v2348, 0.5
  %v2415 = vmul.f32 %v2351, 0.5
  %v2416 = vmul.f32 %v2356, 0.5
  %v2417 = vmul.f32 %v2359, 0.5
  %v2418 = vmul.f32 %v2364, 0.5
  %v2419 = vmul.f32 %v2367, 0.5
  %v2420 = vmul.f32 %v2372, 0.5
  %v2421 = vmul.f32 %v2375, 0.5
  %v2422 = vmul.f32 %v2380, 0.5
  %v2423 = vmul.f32 %v2383, 0.5
  %v2424 = vmul.f32 %v2388, 0.5
  %v2425 = vmul.f32 %v2391, 0.5
  %v2426 = vmul.f32 %v2268, 0.70710677
  %v2427 = vmul.f32 %v2271, 0.70710677
  %v2428 = vmul.f32 %v2276, 0.70710677
  %v2429 = vmul.f32 %v2279, 0.70710677
  %v2430 = vmul.f32 %v2284, 0.70710677
  %v2431 = vmul.f32 %v2287, 0.70710677
  %v2432 = vmul.f32 %v2292, 0.70710677
  %v2433 = vmul.f32 %v2295, 0.70710677
  %v2434 = vmul.f32 %v2300, 0.70710677
  %v2435 = vmul.f32 %v2303, 0.70710677
  %v2436 = vmul.f32 %v2308, 0.70710677
  %v2437 = vmul.f32 %v2311, 0.70710677
  %v2438 = vmul.f32 %v2316, 0.70710677
  %v2439 = vmul.f32 %v2319, 0.70710677
  %v2440 = vmul.f32 %v2324, 0.70710677
  %v2441 = vmul.f32 %v2327, 0.70710677
  %v2442 = vmul.f32 %v2332, 0.70710677
  %v2443 = vmul.f32 %v2335, 0.70710677
  %v2444 = vmul.f32 %v2340, 0.70710677
  %v2445 = vmul.f32 %v2343, 0.70710677
  %v2446 = vmul.f32 %v2348, 0.70710677
  %v2447 = vmul.f32 %v2351, 0.70710677
  %v2448 = vmul.f32 %v2356, 0.70710677
  %v2449 = vmul.f32 %v2359, 0.70710677
  %v2450 = vmul.f32 %v2364, 0.70710677
  %v2451 = vmul.f32 %v2367, 0.70710677
  %v2452 = vmul.f32 %v2372, 0.70710677
  %v2453 = vmul.f32 %v2375, 0.70710677
  %v2454 = vmul.f32 %v2380, 0.70710677
  %v2455 = vmul.f32 %v2383, 0.70710677
  %v2456 = vmul.f32 %v2388, 0.70710677
  %v2457 = vmul.f32 %v2391, 0.70710677
  %v2458 = verf.f32.pop %v2426
  %v2459 = verf.f32.pop %v2427
  %v2460 = verf.f32.pop %v2428
  %v2461 = verf.f32.pop %v2429
  %v2462 = verf.f32.pop %v2430
  %v2463 = verf.f32.pop %v2431
  %v2464 = verf.f32.pop %v2432
  %v2465 = verf.f32.pop %v2433
  %v2466 = verf.f32.pop %v2434
  %v2467 = verf.f32.pop %v2435
  %v2468 = verf.f32.pop %v2436
  %v2469 = verf.f32.pop %v2437
  %v2470 = verf.f32.pop %v2438
  %v2471 = verf.f32.pop %v2439
  %v2472 = verf.f32.pop %v2440
  %v2473 = verf.f32.pop %v2441
  %v2474 = verf.f32.pop %v2442
  %v2475 = verf.f32.pop %v2443
  %v2476 = verf.f32.pop %v2444
  %v2477 = verf.f32.pop %v2445
  %v2478 = verf.f32.pop %v2446
  %v2479 = verf.f32.pop %v2447
  %v2480 = verf.f32.pop %v2448
  %v2481 = verf.f32.pop %v2449
  %v2482 = verf.f32.pop %v2450
  %v2483 = verf.f32.pop %v2451
  %v2484 = verf.f32.pop %v2452
  %v2485 = verf.f32.pop %v2453
  %v2486 = verf.f32.pop %v2454
  %v2487 = verf.f32.pop %v2455
  %v2488 = verf.f32.pop %v2456
  %v2489 = verf.f32.pop %v2457
  %v2490 = vadd.f32 %v2458, 1.0
  %v2491 = vadd.f32 %v2459, 1.0
  %v2492 = vadd.f32 %v2460, 1.0
  %v2493 = vadd.f32 %v2461, 1.0
  %v2494 = vadd.f32 %v2462, 1.0
  %v2495 = vadd.f32 %v2463, 1.0
  %v2496 = vadd.f32 %v2464, 1.0
  %v2497 = vadd.f32 %v2465, 1.0
  %v2498 = vadd.f32 %v2466, 1.0
  %v2499 = vadd.f32 %v2467, 1.0
  %v2500 = vadd.f32 %v2468, 1.0
  %v2501 = vadd.f32 %v2469, 1.0
  %v2502 = vadd.f32 %v2470, 1.0
  %v2503 = vadd.f32 %v2471, 1.0
  %v2504 = vadd.f32 %v2472, 1.0
  %v2505 = vadd.f32 %v2473, 1.0
  %v2506 = vadd.f32 %v2474, 1.0
  %v2507 = vadd.f32 %v2475, 1.0
  %v2508 = vadd.f32 %v2476, 1.0
  %v2509 = vadd.f32 %v2477, 1.0
  %v2510 = vadd.f32 %v2478, 1.0
  %v2511 = vadd.f32 %v2479, 1.0
  %v2512 = vadd.f32 %v2480, 1.0
  %v2513 = vadd.f32 %v2481, 1.0
  %v2514 = vadd.f32 %v2482, 1.0
  %v2515 = vadd.f32 %v2483, 1.0
  %v2516 = vadd.f32 %v2484, 1.0
  %v2517 = vadd.f32 %v2485, 1.0
  %v2518 = vadd.f32 %v2486, 1.0
  %v2519 = vadd.f32 %v2487, 1.0
  %v2520 = vadd.f32 %v2488, 1.0
  %v2521 = vadd.f32 %v2489, 1.0
  %v2522 = vmul.f32 %v2394, %v2490
  %v2523 = vmul.f32 %v2395, %v2491
  %v2524 = vmul.f32 %v2396, %v2492
  %v2525 = vmul.f32 %v2397, %v2493
  %v2526 = vmul.f32 %v2398, %v2494
  %v2527 = vmul.f32 %v2399, %v2495
  %v2528 = vmul.f32 %v2400, %v2496
  %v2529 = vmul.f32 %v2401, %v2497
  %v2530 = vmul.f32 %v2402, %v2498
  %v2531 = vmul.f32 %v2403, %v2499
  %v2532 = vmul.f32 %v2404, %v2500
  %v2533 = vmul.f32 %v2405, %v2501
  %v2534 = vmul.f32 %v2406, %v2502
  %v2535 = vmul.f32 %v2407, %v2503
  %v2536 = vmul.f32 %v2408, %v2504
  %v2537 = vmul.f32 %v2409, %v2505
  %v2538 = vmul.f32 %v2410, %v2506
  %v2539 = vmul.f32 %v2411, %v2507
  %v2540 = vmul.f32 %v2412, %v2508
  %v2541 = vmul.f32 %v2413, %v2509
  %v2542 = vmul.f32 %v2414, %v2510
  %v2543 = vmul.f32 %v2415, %v2511
  %v2544 = vmul.f32 %v2416, %v2512
  %v2545 = vmul.f32 %v2417, %v2513
  %v2546 = vmul.f32 %v2418, %v2514
  %v2547 = vmul.f32 %v2419, %v2515
  %v2548 = vmul.f32 %v2420, %v2516
  %v2549 = vmul.f32 %v2421, %v2517
  %v2550 = vmul.f32 %v2422, %v2518
  %v2551 = vmul.f32 %v2423, %v2519
  %v2552 = vmul.f32 %v2424, %v2520
  %v2553 = vmul.f32 %v2425, %v2521
  %v2554 = vld [vmem:[%s5] sm:$0xff]
  %v2555 = vld [vmem:[%s5 + $0x8] sm:$0xff]
  %v2556 = vld [vmem:[%s5 + $0x10] sm:$0xff]
  %v2557 = vld [vmem:[%s5 + $0x18] sm:$0xff]
  %v2558 = vld [vmem:[%s5 + $0x20] sm:$0xff]
  %v2559 = vld [vmem:[%s5 + $0x28] sm:$0xff]
  %v2560 = vld [vmem:[%s5 + $0x30] sm:$0xff]
  %v2561 = vld [vmem:[%s5 + $0x38] sm:$0xff]
  %v2562 = vld [vmem:[%s5 + $0x40] sm:$0xff]
  %v2563 = vld [vmem:[%s5 + $0x48] sm:$0xff]
  %v2564 = vld [vmem:[%s5 + $0x50] sm:$0xff]
  %v2565 = vld [vmem:[%s5 + $0x58] sm:$0xff]
  %v2566 = vld [vmem:[%s5 + $0x60] sm:$0xff]
  %v2567 = vld [vmem:[%s5 + $0x68] sm:$0xff]
  %v2568 = vld [vmem:[%s5 + $0x70] sm:$0xff]
  %v2569 = vld [vmem:[%s5 + $0x78] sm:$0xff]
  %v2570 = vpack.c.bf16 %v2523, %v2522
  %v2571 = vpack.c.bf16 %v2525, %v2524
  %v2572 = vpack.c.bf16 %v2527, %v2526
  %v2573 = vpack.c.bf16 %v2529, %v2528
  %v2574 = vpack.c.bf16 %v2531, %v2530
  %v2575 = vpack.c.bf16 %v2533, %v2532
  %v2576 = vpack.c.bf16 %v2535, %v2534
  %v2577 = vpack.c.bf16 %v2537, %v2536
  %v2578 = vpack.c.bf16 %v2539, %v2538
  %v2579 = vpack.c.bf16 %v2541, %v2540
  %v2580 = vpack.c.bf16 %v2543, %v2542
  %v2581 = vpack.c.bf16 %v2545, %v2544
  %v2582 = vpack.c.bf16 %v2547, %v2546
  %v2583 = vpack.c.bf16 %v2549, %v2548
  %v2584 = vpack.c.bf16 %v2551, %v2550
  %v2585 = vpack.c.bf16 %v2553, %v2552
  %v2586 = vld [vmem:[%s6] sm:$0xff]
  %v2587 = vld [vmem:[%s6 + $0x8] sm:$0xff]
  %v2588 = vld [vmem:[%s6 + $0x10] sm:$0xff]
  %v2589 = vld [vmem:[%s6 + $0x18] sm:$0xff]
  %v2590 = vld [vmem:[%s6 + $0x20] sm:$0xff]
  %v2591 = vld [vmem:[%s6 + $0x28] sm:$0xff]
  %v2592 = vld [vmem:[%s6 + $0x30] sm:$0xff]
  %v2593 = vld [vmem:[%s6 + $0x38] sm:$0xff]
  %v2594 = vld [vmem:[%s6 + $0x40] sm:$0xff]
  %v2595 = vld [vmem:[%s6 + $0x48] sm:$0xff]
  %v2596 = vld [vmem:[%s6 + $0x50] sm:$0xff]
  %v2597 = vld [vmem:[%s6 + $0x58] sm:$0xff]
  %v2598 = vld [vmem:[%s6 + $0x60] sm:$0xff]
  %v2599 = vld [vmem:[%s6 + $0x68] sm:$0xff]
  %v2600 = vld [vmem:[%s6 + $0x70] sm:$0xff]
  %v2601 = vld [vmem:[%s6 + $0x78] sm:$0xff]
  %2603 = vset.pattern.permute.xlu0 0
  %2604 = vperm.xlu0 %2603, %v2586
  %v2605 = vpop.permute.xlu0 %2604
  %2608 = vset.pattern.permute.xlu0 0
  %2609 = vperm.xlu0 %2608, %v2587
  %v2610 = vpop.permute.xlu0 %2609
  %2613 = vset.pattern.permute.xlu0 0
  %2614 = vperm.xlu0 %2613, %v2588
  %v2615 = vpop.permute.xlu0 %2614
  %2618 = vset.pattern.permute.xlu0 0
  %2619 = vperm.xlu0 %2618, %v2589
  %v2620 = vpop.permute.xlu0 %2619
  %2623 = vset.pattern.permute.xlu0 0
  %2624 = vperm.xlu0 %2623, %v2590
  %v2625 = vpop.permute.xlu0 %2624
  %2628 = vset.pattern.permute.xlu0 0
  %2629 = vperm.xlu0 %2628, %v2591
  %v2630 = vpop.permute.xlu0 %2629
  %2633 = vset.pattern.permute.xlu0 0
  %2634 = vperm.xlu0 %2633, %v2592
  %v2635 = vpop.permute.xlu0 %2634
  %2638 = vset.pattern.permute.xlu0 0
  %2639 = vperm.xlu0 %2638, %v2593
  %v2640 = vpop.permute.xlu0 %2639
  %2643 = vset.pattern.permute.xlu0 0
  %2644 = vperm.xlu0 %2643, %v2594
  %v2645 = vpop.permute.xlu0 %2644
  %2648 = vset.pattern.permute.xlu0 0
  %2649 = vperm.xlu0 %2648, %v2595
  %v2650 = vpop.permute.xlu0 %2649
  %2653 = vset.pattern.permute.xlu0 0
  %2654 = vperm.xlu0 %2653, %v2596
  %v2655 = vpop.permute.xlu0 %2654
  %2658 = vset.pattern.permute.xlu0 0
  %2659 = vperm.xlu0 %2658, %v2597
  %v2660 = vpop.permute.xlu0 %2659
  %2663 = vset.pattern.permute.xlu0 0
  %2664 = vperm.xlu0 %2663, %v2598
  %v2665 = vpop.permute.xlu0 %2664
  %2668 = vset.pattern.permute.xlu0 0
  %2669 = vperm.xlu0 %2668, %v2599
  %v2670 = vpop.permute.xlu0 %2669
  %2673 = vset.pattern.permute.xlu0 0
  %2674 = vperm.xlu0 %2673, %v2600
  %v2675 = vpop.permute.xlu0 %2674
  %2678 = vset.pattern.permute.xlu0 0
  %2679 = vperm.xlu0 %2678, %v2601
  %v2680 = vpop.permute.xlu0 %2679
  %v2698 = vunpack.c.l.b16 %v2554
  %v2699 = vunpack.c.h.b16 %v2554
  %v2700 = vunpack.c.l.b16 %v2555
  %v2701 = vunpack.c.h.b16 %v2555
  %v2702 = vunpack.c.l.b16 %v2556
  %v2703 = vunpack.c.h.b16 %v2556
  %v2704 = vunpack.c.l.b16 %v2557
  %v2705 = vunpack.c.h.b16 %v2557
  %v2706 = vunpack.c.l.b16 %v2558
  %v2707 = vunpack.c.h.b16 %v2558
  %v2708 = vunpack.c.l.b16 %v2559
  %v2709 = vunpack.c.h.b16 %v2559
  %v2710 = vunpack.c.l.b16 %v2560
  %v2711 = vunpack.c.h.b16 %v2560
  %v2712 = vunpack.c.l.b16 %v2561
  %v2713 = vunpack.c.h.b16 %v2561
  %v2714 = vunpack.c.l.b16 %v2562
  %v2715 = vunpack.c.h.b16 %v2562
  %v2716 = vunpack.c.l.b16 %v2563
  %v2717 = vunpack.c.h.b16 %v2563
  %v2718 = vunpack.c.l.b16 %v2564
  %v2719 = vunpack.c.h.b16 %v2564
  %v2720 = vunpack.c.l.b16 %v2565
  %v2721 = vunpack.c.h.b16 %v2565
  %v2722 = vunpack.c.l.b16 %v2566
  %v2723 = vunpack.c.h.b16 %v2566
  %v2724 = vunpack.c.l.b16 %v2567
  %v2725 = vunpack.c.h.b16 %v2567
  %v2726 = vunpack.c.l.b16 %v2568
  %v2727 = vunpack.c.h.b16 %v2568
  %v2728 = vunpack.c.l.b16 %v2569
  %v2729 = vunpack.c.h.b16 %v2569
  %v2730 = vpack.c.b16 %v2700, %v2698
  %v2731 = vpack.c.b16 %v2701, %v2699
  %v2732 = vpack.c.b16 %v2704, %v2702
  %v2733 = vpack.c.b16 %v2705, %v2703
  %v2734 = vpack.c.b16 %v2708, %v2706
  %v2735 = vpack.c.b16 %v2709, %v2707
  %v2736 = vpack.c.b16 %v2712, %v2710
  %v2737 = vpack.c.b16 %v2713, %v2711
  %v2738 = vpack.c.b16 %v2716, %v2714
  %v2739 = vpack.c.b16 %v2717, %v2715
  %v2740 = vpack.c.b16 %v2720, %v2718
  %v2741 = vpack.c.b16 %v2721, %v2719
  %v2742 = vpack.c.b16 %v2724, %v2722
  %v2743 = vpack.c.b16 %v2725, %v2723
  %v2744 = vpack.c.b16 %v2728, %v2726
  %v2745 = vpack.c.b16 %v2729, %v2727
  %2762 = vmatprep.subr.bf16.mxu0 0
  %2763 = vmatpush1.bf16.msra.mxu0 %v2570
  %2764 = vmatprep.subr.bf16.mxu0 0
  %2765 = vmatpush1.bf16.msra.mxu0 %v2571
  %2766 = vmatprep.subr.bf16.mxu0 0
  %2767 = vmatpush1.bf16.msra.mxu0 %v2572
  %2768 = vmatprep.subr.bf16.mxu0 0
  %2769 = vmatpush1.bf16.msra.mxu0 %v2573
  %2770 = vmatprep.subr.bf16.mxu0 0
  %2771 = vmatpush1.bf16.msra.mxu0 %v2574
  %2772 = vmatprep.subr.bf16.mxu0 0
  %2773 = vmatpush1.bf16.msra.mxu0 %v2575
  %2774 = vmatprep.subr.bf16.mxu0 0
  %2775 = vmatpush1.bf16.msra.mxu0 %v2576
  %2776 = vmatprep.subr.bf16.mxu0 0
  %2777 = vmatpush1.bf16.msra.mxu0 %v2577
  %2778 = vmatprep.subr.bf16.mxu0 0
  %2779 = vmatpush1.bf16.msra.mxu0 %v2578
  %2780 = vmatprep.subr.bf16.mxu0 0
  %2781 = vmatpush1.bf16.msra.mxu0 %v2579
  %2782 = vmatprep.subr.bf16.mxu0 0
  %2783 = vmatpush1.bf16.msra.mxu0 %v2580
  %2784 = vmatprep.subr.bf16.mxu0 0
  %2785 = vmatpush1.bf16.msra.mxu0 %v2581
  %2786 = vmatprep.subr.bf16.mxu0 0
  %2787 = vmatpush1.bf16.msra.mxu0 %v2582
  %2788 = vmatprep.subr.bf16.mxu0 0
  %2789 = vmatpush1.bf16.msra.mxu0 %v2583
  %2790 = vmatprep.subr.bf16.mxu0 0
  %2791 = vmatpush1.bf16.msra.mxu0 %v2584
  %2792 = vmatprep.subr.bf16.mxu0 0
  %2793 = vmatpush1.bf16.msra.mxu0 %v2585
  %2794 = vmatprep.mubr.bf16.mxu0 %v2731
  %2795 = vmatmul.mubr.bf16.gmra.mrb[0].mxu0 %v2730
  %v2796 = vpop.f32.mrb[0].mxu0
  %v2797 = vadd.f32 %v2605, %v2796
  %v2798 = vpop.f32.mrb[0].mxu0
  %v2799 = vpop.f32.mrb[0].mxu0
  %v2800 = vadd.f32 %v2610, %v2799
  %v2801 = vpop.f32.mrb[0].mxu0
  %2802 = vmatprep.mubr.bf16.mxu0 %v2733
  %2803 = vmatmul.mubr.bf16.gmra.mrb[0].mxu0 %v2732
  %v2804 = vpop.f32.mrb[0].mxu0
  %v2805 = vadd.f32 %v2615, %v2804
  %v2806 = vpop.f32.mrb[0].mxu0
  %v2807 = vpop.f32.mrb[0].mxu0
  %v2808 = vadd.f32 %v2620, %v2807
  %v2809 = vpop.f32.mrb[0].mxu0
  %2810 = vmatprep.mubr.bf16.mxu0 %v2735
  %2811 = vmatmul.mubr.bf16.gmra.mrb[0].mxu0 %v2734
  %v2812 = vpop.f32.mrb[0].mxu0
  %v2813 = vadd.f32 %v2625, %v2812
  %v2814 = vpop.f32.mrb[0].mxu0
  %v2815 = vpop.f32.mrb[0].mxu0
  %v2816 = vadd.f32 %v2630, %v2815
  %v2817 = vpop.f32.mrb[0].mxu0
  %2818 = vmatprep.mubr.bf16.mxu0 %v2737
  %2819 = vmatmul.mubr.bf16.gmra.mrb[0].mxu0 %v2736
  %v2820 = vpop.f32.mrb[0].mxu0
  %v2821 = vadd.f32 %v2635, %v2820
  %v2822 = vpop.f32.mrb[0].mxu0
  %v2823 = vpop.f32.mrb[0].mxu0
  %v2824 = vadd.f32 %v2640, %v2823
  %v2825 = vpop.f32.mrb[0].mxu0
  %2826 = vmatprep.mubr.bf16.mxu0 %v2739
  %2827 = vmatmul.mubr.bf16.gmra.mrb[0].mxu0 %v2738
  %v2828 = vpop.f32.mrb[0].mxu0
  %v2829 = vadd.f32 %v2645, %v2828
  %v2830 = vpop.f32.mrb[0].mxu0
  %v2831 = vpop.f32.mrb[0].mxu0
  %v2832 = vadd.f32 %v2650, %v2831
  %v2833 = vpop.f32.mrb[0].mxu0
  %2834 = vmatprep.mubr.bf16.mxu0 %v2741
  %2835 = vmatmul.mubr.bf16.gmra.mrb[0].mxu0 %v2740
  %v2836 = vpop.f32.mrb[0].mxu0
  %v2837 = vadd.f32 %v2655, %v2836
  %v2838 = vpop.f32.mrb[0].mxu0
  %v2839 = vpop.f32.mrb[0].mxu0
  %v2840 = vadd.f32 %v2660, %v2839
  %v2841 = vpop.f32.mrb[0].mxu0
  %2842 = vmatprep.mubr.bf16.mxu0 %v2743
  %2843 = vmatmul.mubr.bf16.gmra.mrb[0].mxu0 %v2742
  %v2844 = vpop.f32.mrb[0].mxu0
  %v2845 = vadd.f32 %v2665, %v2844
  %v2846 = vpop.f32.mrb[0].mxu0
  %v2847 = vpop.f32.mrb[0].mxu0
  %v2848 = vadd.f32 %v2670, %v2847
  %v2849 = vpop.f32.mrb[0].mxu0
  %2850 = vmatprep.mubr.bf16.mxu0 %v2745
  %2851 = vmatmul.mubr.bf16.gmra.mrb[0].mxu0 %v2744
  %v2852 = vpop.f32.mrb[0].mxu0
  %v2853 = vadd.f32 %v2675, %v2852
  %v2854 = vpop.f32.mrb[0].mxu0
  %v2855 = vpop.f32.mrb[0].mxu0
  %v2856 = vadd.f32 %v2680, %v2855
  %v2857 = vpop.f32.mrb[0].mxu0
  %2858 = vdwg.mxu0
  %v2859 = vmul.f32 %v2797, 0.5
  %v2860 = vmul.f32 %v2800, 0.5
  %v2861 = vmul.f32 %v2805, 0.5
  %v2862 = vmul.f32 %v2808, 0.5
  %v2863 = vmul.f32 %v2813, 0.5
  %v2864 = vmul.f32 %v2816, 0.5
  %v2865 = vmul.f32 %v2821, 0.5
  %v2866 = vmul.f32 %v2824, 0.5
  %v2867 = vmul.f32 %v2829, 0.5
  %v2868 = vmul.f32 %v2832, 0.5
  %v2869 = vmul.f32 %v2837, 0.5
  %v2870 = vmul.f32 %v2840, 0.5
  %v2871 = vmul.f32 %v2845, 0.5
  %v2872 = vmul.f32 %v2848, 0.5
  %v2873 = vmul.f32 %v2853, 0.5
  %v2874 = vmul.f32 %v2856, 0.5
  %v2875 = vmul.f32 %v2797, 0.70710677
  %v2876 = vmul.f32 %v2800, 0.70710677
  %v2877 = vmul.f32 %v2805, 0.70710677
  %v2878 = vmul.f32 %v2808, 0.70710677
  %v2879 = vmul.f32 %v2813, 0.70710677
  %v2880 = vmul.f32 %v2816, 0.70710677
  %v2881 = vmul.f32 %v2821, 0.70710677
  %v2882 = vmul.f32 %v2824, 0.70710677
  %v2883 = vmul.f32 %v2829, 0.70710677
  %v2884 = vmul.f32 %v2832, 0.70710677
  %v2885 = vmul.f32 %v2837, 0.70710677
  %v2886 = vmul.f32 %v2840, 0.70710677
  %v2887 = vmul.f32 %v2845, 0.70710677
  %v2888 = vmul.f32 %v2848, 0.70710677
  %v2889 = vmul.f32 %v2853, 0.70710677
  %v2890 = vmul.f32 %v2856, 0.70710677
  %v2891 = verf.f32.pop %v2875
  %v2892 = verf.f32.pop %v2876
  %v2893 = verf.f32.pop %v2877
  %v2894 = verf.f32.pop %v2878
  %v2895 = verf.f32.pop %v2879
  %v2896 = verf.f32.pop %v2880
  %v2897 = verf.f32.pop %v2881
  %v2898 = verf.f32.pop %v2882
  %v2899 = verf.f32.pop %v2883
  %v2900 = verf.f32.pop %v2884
  %v2901 = verf.f32.pop %v2885
  %v2902 = verf.f32.pop %v2886
  %v2903 = verf.f32.pop %v2887
  %v2904 = verf.f32.pop %v2888
  %v2905 = verf.f32.pop %v2889
  %v2906 = verf.f32.pop %v2890
  %v2907 = vadd.f32 %v2891, 1.0
  %v2908 = vadd.f32 %v2892, 1.0
  %v2909 = vadd.f32 %v2893, 1.0
  %v2910 = vadd.f32 %v2894, 1.0
  %v2911 = vadd.f32 %v2895, 1.0
  %v2912 = vadd.f32 %v2896, 1.0
  %v2913 = vadd.f32 %v2897, 1.0
  %v2914 = vadd.f32 %v2898, 1.0
  %v2915 = vadd.f32 %v2899, 1.0
  %v2916 = vadd.f32 %v2900, 1.0
  %v2917 = vadd.f32 %v2901, 1.0
  %v2918 = vadd.f32 %v2902, 1.0
  %v2919 = vadd.f32 %v2903, 1.0
  %v2920 = vadd.f32 %v2904, 1.0
  %v2921 = vadd.f32 %v2905, 1.0
  %v2922 = vadd.f32 %v2906, 1.0
  %v2923 = vmul.f32 %v2859, %v2907
  %v2924 = vmul.f32 %v2860, %v2908
  %v2925 = vmul.f32 %v2861, %v2909
  %v2926 = vmul.f32 %v2862, %v2910
  %v2927 = vmul.f32 %v2863, %v2911
  %v2928 = vmul.f32 %v2864, %v2912
  %v2929 = vmul.f32 %v2865, %v2913
  %v2930 = vmul.f32 %v2866, %v2914
  %v2931 = vmul.f32 %v2867, %v2915
  %v2932 = vmul.f32 %v2868, %v2916
  %v2933 = vmul.f32 %v2869, %v2917
  %v2934 = vmul.f32 %v2870, %v2918
  %v2935 = vmul.f32 %v2871, %v2919
  %v2936 = vmul.f32 %v2872, %v2920
  %v2937 = vmul.f32 %v2873, %v2921
  %v2938 = vmul.f32 %v2874, %v2922
  %v2939 = vld [vmem:[%s7] sm:$0xf]
  %v2940 = vld [vmem:[%s7 + $0x4] sm:$0xf]
  %v2941 = vld [vmem:[%s7 + $0x8] sm:$0xf]
  %v2942 = vld [vmem:[%s7 + $0xc] sm:$0xf]
  %v2943 = vld [vmem:[%s7 + $0x10] sm:$0xf]
  %v2944 = vld [vmem:[%s7 + $0x14] sm:$0xf]
  %v2945 = vld [vmem:[%s7 + $0x18] sm:$0xf]
  %v2946 = vld [vmem:[%s7 + $0x1c] sm:$0xf]
  %v2947 = vpack.c.bf16 %v2924, %v2923
  %v2948 = vpack.c.bf16 %v2926, %v2925
  %v2949 = vpack.c.bf16 %v2928, %v2927
  %v2950 = vpack.c.bf16 %v2930, %v2929
  %v2951 = vpack.c.bf16 %v2932, %v2931
  %v2952 = vpack.c.bf16 %v2934, %v2933
  %v2953 = vpack.c.bf16 %v2936, %v2935
  %v2954 = vpack.c.bf16 %v2938, %v2937
  %v2955 = vld [vmem:[%s8] sm:$0xff]
  %v2956 = vld [vmem:[%s8 + $0x8] sm:$0xff]
  %v2957 = vld [vmem:[%s8 + $0x10] sm:$0xff]
  %v2958 = vld [vmem:[%s8 + $0x18] sm:$0xff]
  %v2959 = vld [vmem:[%s8 + $0x20] sm:$0xff]
  %v2960 = vld [vmem:[%s8 + $0x28] sm:$0xff]
  %v2961 = vld [vmem:[%s8 + $0x30] sm:$0xff]
  %v2962 = vld [vmem:[%s8 + $0x38] sm:$0xff]
  %2964 = vset.pattern.permute.xlu0 0
  %2965 = vperm.xlu0 %2964, %v2955
  %v2966 = vpop.permute.xlu0 %2965
  %2969 = vset.pattern.permute.xlu0 0
  %2970 = vperm.xlu0 %2969, %v2956
  %v2971 = vpop.permute.xlu0 %2970
  %2974 = vset.pattern.permute.xlu0 0
  %2975 = vperm.xlu0 %2974, %v2957
  %v2976 = vpop.permute.xlu0 %2975
  %2979 = vset.pattern.permute.xlu0 0
  %2980 = vperm.xlu0 %2979, %v2958
  %v2981 = vpop.permute.xlu0 %2980
  %2984 = vset.pattern.permute.xlu0 0
  %2985 = vperm.xlu0 %2984, %v2959
  %v2986 = vpop.permute.xlu0 %2985
  %2989 = vset.pattern.permute.xlu0 0
  %2990 = vperm.xlu0 %2989, %v2960
  %v2991 = vpop.permute.xlu0 %2990
  %2994 = vset.pattern.permute.xlu0 0
  %2995 = vperm.xlu0 %2994, %v2961
  %v2996 = vpop.permute.xlu0 %2995
  %2999 = vset.pattern.permute.xlu0 0
  %3000 = vperm.xlu0 %2999, %v2962
  %v3001 = vpop.permute.xlu0 %3000
  %v3011 = vunpack.c.l.b16 %v2939
  %v3012 = vunpack.c.l.b16 %v2940
  %v3013 = vunpack.c.l.b16 %v2941
  %v3014 = vunpack.c.l.b16 %v2942
  %v3015 = vunpack.c.l.b16 %v2943
  %v3016 = vunpack.c.l.b16 %v2944
  %v3017 = vunpack.c.l.b16 %v2945
  %v3018 = vunpack.c.l.b16 %v2946
  %v3019 = vpack.c.b16 %v3012, %v3011
  %v3020 = vpack.c.b16 %v3014, %v3013
  %v3021 = vpack.c.b16 %v3016, %v3015
  %v3022 = vpack.c.b16 %v3018, %v3017
  %3027 = vmatprep.subr.bf16.mxu0 0
  %3028 = vmatpush1.bf16.msra.mxu0 %v2947
  %3029 = vmatprep.subr.bf16.mxu0 0
  %3030 = vmatpush1.bf16.msra.mxu0 %v2948
  %3031 = vmatprep.subr.bf16.mxu0 0
  %3032 = vmatpush1.bf16.msra.mxu0 %v2949
  %3033 = vmatprep.subr.bf16.mxu0 0
  %3034 = vmatpush1.bf16.msra.mxu0 %v2950
  %3035 = vmatprep.subr.bf16.mxu0 0
  %3036 = vmatpush1.bf16.msra.mxu0 %v2951
  %3037 = vmatprep.subr.bf16.mxu0 0
  %3038 = vmatpush1.bf16.msra.mxu0 %v2952
  %3039 = vmatprep.subr.bf16.mxu0 0
  %3040 = vmatpush1.bf16.msra.mxu0 %v2953
  %3041 = vmatprep.subr.bf16.mxu0 0
  %3042 = vmatpush1.bf16.msra.mxu0 %v2954
  %3043 = vmatprep.subr.bf16.mxu0 0
  %3044 = vmatpush1.bf16.msra.mxu0 0
  %3045 = vmatprep.subr.bf16.mxu0 0
  %3046 = vmatpush1.bf16.msra.mxu0 0
  %3047 = vmatprep.subr.bf16.mxu0 0
  %3048 = vmatpush1.bf16.msra.mxu0 0
  %3049 = vmatprep.subr.bf16.mxu0 0
  %3050 = vmatpush1.bf16.msra.mxu0 0
  %3051 = vmatprep.subr.bf16.mxu0 0
  %3052 = vmatpush1.bf16.msra.mxu0 0
  %3053 = vmatprep.subr.bf16.mxu0 0
  %3054 = vmatpush1.bf16.msra.mxu0 0
  %3055 = vmatprep.subr.bf16.mxu0 0
  %3056 = vmatpush1.bf16.msra.mxu0 0
  %3057 = vmatprep.subr.bf16.mxu0 0
  %3058 = vmatpush1.bf16.msra.mxu0 0
  %3059 = vmatprep.mubr.bf16.mxu0 0
  %3060 = vmatmul.mubr.bf16.gmra.mrb[0].mxu0 %v3019
  %v3061 = vpop.f32.mrb[0].mxu0
  %v3062 = vadd.f32 %v2966, %v3061
  %v3063 = vpop.f32.mrb[0].mxu0
  %v3064 = vpop.f32.mrb[0].mxu0
  %v3065 = vadd.f32 %v2971, %v3064
  %v3066 = vpop.f32.mrb[0].mxu0
  %3067 = vmatprep.mubr.bf16.mxu0 0
  %3068 = vmatmul.mubr.bf16.gmra.mrb[0].mxu0 %v3020
  %v3069 = vpop.f32.mrb[0].mxu0
  %v3070 = vadd.f32 %v2976, %v3069
  %v3071 = vpop.f32.mrb[0].mxu0
  %v3072 = vpop.f32.mrb[0].mxu0
  %v3073 = vadd.f32 %v2981, %v3072
  %v3074 = vpop.f32.mrb[0].mxu0
  %3075 = vmatprep.mubr.bf16.mxu0 0
  %3076 = vmatmul.mubr.bf16.gmra.mrb[0].mxu0 %v3021
  %v3077 = vpop.f32.mrb[0].mxu0
  %v3078 = vadd.f32 %v2986, %v3077
  %v3079 = vpop.f32.mrb[0].mxu0
  %v3080 = vpop.f32.mrb[0].mxu0
  %v3081 = vadd.f32 %v2991, %v3080
  %v3082 = vpop.f32.mrb[0].mxu0
  %3083 = vmatprep.mubr.bf16.mxu0 0
  %3084 = vmatmul.mubr.bf16.gmra.mrb[0].mxu0 %v3022
  %v3085 = vpop.f32.mrb[0].mxu0
  %v3086 = vadd.f32 %v2996, %v3085
  %v3087 = vpop.f32.mrb[0].mxu0
  %v3088 = vpop.f32.mrb[0].mxu0
  %v3089 = vadd.f32 %v3001, %v3088
  %v3090 = vpop.f32.mrb[0].mxu0
  %3091 = vdwg.mxu0
  %v3092 = vmul.f32 %v3062, 0.5
  %v3093 = vmul.f32 %v3065, 0.5
  %v3094 = vmul.f32 %v3070, 0.5
  %v3095 = vmul.f32 %v3073, 0.5
  %v3096 = vmul.f32 %v3078, 0.5
  %v3097 = vmul.f32 %v3081, 0.5
  %v3098 = vmul.f32 %v3086, 0.5
  %v3099 = vmul.f32 %v3089, 0.5
  %v3100 = vmul.f32 %v3062, 0.70710677
  %v3101 = vmul.f32 %v3065, 0.70710677
  %v3102 = vmul.f32 %v3070, 0.70710677
  %v3103 = vmul.f32 %v3073, 0.70710677
  %v3104 = vmul.f32 %v3078, 0.70710677
  %v3105 = vmul.f32 %v3081, 0.70710677
  %v3106 = vmul.f32 %v3086, 0.70710677
  %v3107 = vmul.f32 %v3089, 0.70710677
  %v3108 = verf.f32.pop %v3100
  %v3109 = verf.f32.pop %v3101
  %v3110 = verf.f32.pop %v3102
  %v3111 = verf.f32.pop %v3103
  %v3112 = verf.f32.pop %v3104
  %v3113 = verf.f32.pop %v3105
  %v3114 = verf.f32.pop %v3106
  %v3115 = verf.f32.pop %v3107
  %v3116 = vadd.f32 %v3108, 1.0
  %v3117 = vadd.f32 %v3109, 1.0
  %v3118 = vadd.f32 %v3110, 1.0
  %v3119 = vadd.f32 %v3111, 1.0
  %v3120 = vadd.f32 %v3112, 1.0
  %v3121 = vadd.f32 %v3113, 1.0
  %v3122 = vadd.f32 %v3114, 1.0
  %v3123 = vadd.f32 %v3115, 1.0
  %v3124 = vmul.f32 %v3092, %v3116
  %v3125 = vmul.f32 %v3093, %v3117
  %v3126 = vmul.f32 %v3094, %v3118
  %v3127 = vmul.f32 %v3095, %v3119
  %v3128 = vmul.f32 %v3096, %v3120
  %v3129 = vmul.f32 %v3097, %v3121
  %v3130 = vmul.f32 %v3098, %v3122
  %v3131 = vmul.f32 %v3099, %v3123
  %v3132 = vld [vmem:[%s9] sm:$0xf]
  %v3133 = vld [vmem:[%s9 + $0x4] sm:$0xf]
  %v3134 = vld [vmem:[%s9 + $0x8] sm:$0xf]
  %v3135 = vld [vmem:[%s9 + $0xc] sm:$0xf]
  %v3136 = vld [vmem:[%s9 + $0x10] sm:$0xf]
  %v3137 = vld [vmem:[%s9 + $0x14] sm:$0xf]
  %v3138 = vld [vmem:[%s9 + $0x18] sm:$0xf]
  %v3139 = vld [vmem:[%s9 + $0x1c] sm:$0xf]
  %v3140 = vpack.c.bf16 %v3125, %v3124
  %v3141 = vpack.c.bf16 %v3127, %v3126
  %v3142 = vpack.c.bf16 %v3129, %v3128
  %v3143 = vpack.c.bf16 %v3131, %v3130
  %v3144 = vld [vmem:[%s10] sm:$0xff]
  %v3145 = vld [vmem:[%s10 + $0x8] sm:$0xff]
  %v3146 = vld [vmem:[%s10 + $0x10] sm:$0xff]
  %v3147 = vld [vmem:[%s10 + $0x18] sm:$0xff]
  %v3148 = vld [vmem:[%s10 + $0x20] sm:$0xff]
  %v3149 = vld [vmem:[%s10 + $0x28] sm:$0xff]
  %v3150 = vld [vmem:[%s10 + $0x30] sm:$0xff]
  %v3151 = vld [vmem:[%s10 + $0x38] sm:$0xff]
  %3153 = vset.pattern.permute.xlu0 0
  %3154 = vperm.xlu0 %3153, %v3144
  %v3155 = vpop.permute.xlu0 %3154
  %3158 = vset.pattern.permute.xlu0 0
  %3159 = vperm.xlu0 %3158, %v3145
  %v3160 = vpop.permute.xlu0 %3159
  %3163 = vset.pattern.permute.xlu0 0
  %3164 = vperm.xlu0 %3163, %v3146
  %v3165 = vpop.permute.xlu0 %3164
  %3168 = vset.pattern.permute.xlu0 0
  %3169 = vperm.xlu0 %3168, %v3147
  %v3170 = vpop.permute.xlu0 %3169
  %3173 = vset.pattern.permute.xlu0 0
  %3174 = vperm.xlu0 %3173, %v3148
  %v3175 = vpop.permute.xlu0 %3174
  %3178 = vset.pattern.permute.xlu0 0
  %3179 = vperm.xlu0 %3178, %v3149
  %v3180 = vpop.permute.xlu0 %3179
  %3183 = vset.pattern.permute.xlu0 0
  %3184 = vperm.xlu0 %3183, %v3150
  %v3185 = vpop.permute.xlu0 %3184
  %3188 = vset.pattern.permute.xlu0 0
  %3189 = vperm.xlu0 %3188, %v3151
  %v3190 = vpop.permute.xlu0 %3189
  %v3200 = vunpack.c.l.b16 %v3132
  %v3201 = vunpack.c.l.b16 %v3133
  %v3202 = vunpack.c.l.b16 %v3134
  %v3203 = vunpack.c.l.b16 %v3135
  %v3204 = vunpack.c.l.b16 %v3136
  %v3205 = vunpack.c.l.b16 %v3137
  %v3206 = vunpack.c.l.b16 %v3138
  %v3207 = vunpack.c.l.b16 %v3139
  %v3208 = vpack.c.b16 %v3201, %v3200
  %v3209 = vpack.c.b16 %v3203, %v3202
  %v3210 = vpack.c.b16 %v3205, %v3204
  %v3211 = vpack.c.b16 %v3207, %v3206
  %vm3212 = vcmask 523264
  %v3214 = vsel %vm3212, %v3208, 0
  %v3217 = vsel %vm3212, %v3209, 0
  %v3220 = vsel %vm3212, %v3210, 0
  %v3223 = vsel %vm3212, %v3211, 0
  %3225 = vmatprep.subr.bf16.mxu0 0
  %3226 = vmatpush1.bf16.msra.mxu0 %v3140
  %3227 = vmatprep.subr.bf16.mxu0 0
  %3228 = vmatpush1.bf16.msra.mxu0 %v3141
  %3229 = vmatprep.subr.bf16.mxu0 0
  %3230 = vmatpush1.bf16.msra.mxu0 %v3142
  %3231 = vmatprep.subr.bf16.mxu0 0
  %3232 = vmatpush1.bf16.msra.mxu0 %v3143
  %3233 = vmatprep.subr.bf16.mxu0 0
  %3234 = vmatpush1.bf16.msra.mxu0 0
  %3235 = vmatprep.subr.bf16.mxu0 0
  %3236 = vmatpush1.bf16.msra.mxu0 0
  %3237 = vmatprep.subr.bf16.mxu0 0
  %3238 = vmatpush1.bf16.msra.mxu0 0
  %3239 = vmatprep.subr.bf16.mxu0 0
  %3240 = vmatpush1.bf16.msra.mxu0 0
  %3241 = vmatprep.subr.bf16.mxu0 0
  %3242 = vmatpush1.bf16.msra.mxu0 0
  %3243 = vmatprep.subr.bf16.mxu0 0
  %3244 = vmatpush1.bf16.msra.mxu0 0
  %3245 = vmatprep.subr.bf16.mxu0 0
  %3246 = vmatpush1.bf16.msra.mxu0 0
  %3247 = vmatprep.subr.bf16.mxu0 0
  %3248 = vmatpush1.bf16.msra.mxu0 0
  %3249 = vmatprep.subr.bf16.mxu0 0
  %3250 = vmatpush1.bf16.msra.mxu0 0
  %3251 = vmatprep.subr.bf16.mxu0 0
  %3252 = vmatpush1.bf16.msra.mxu0 0
  %3253 = vmatprep.subr.bf16.mxu0 0
  %3254 = vmatpush1.bf16.msra.mxu0 0
  %3255 = vmatprep.subr.bf16.mxu0 0
  %3256 = vmatpush1.bf16.msra.mxu0 0
  %3257 = vmatprep.mubr.bf16.mxu0 0
  %3258 = vmatmul.mubr.bf16.gmra.mrb[0].mxu0 %v3214
  %v3259 = vpop.f32.mrb[0].mxu0
  %v3260 = vadd.f32 %v3155, %v3259
  %v3261 = vpop.f32.mrb[0].mxu0
  %v3262 = vpop.f32.mrb[0].mxu0
  %v3263 = vadd.f32 %v3160, %v3262
  %v3264 = vpop.f32.mrb[0].mxu0
  %3265 = vmatprep.mubr.bf16.mxu0 0
  %3266 = vmatmul.mubr.bf16.gmra.mrb[0].mxu0 %v3217
  %v3267 = vpop.f32.mrb[0].mxu0
  %v3268 = vadd.f32 %v3165, %v3267
  %v3269 = vpop.f32.mrb[0].mxu0
  %v3270 = vpop.f32.mrb[0].mxu0
  %v3271 = vadd.f32 %v3170, %v3270
  %v3272 = vpop.f32.mrb[0].mxu0
  %3273 = vmatprep.mubr.bf16.mxu0 0
  %3274 = vmatmul.mubr.bf16.gmra.mrb[0].mxu0 %v3220
  %v3275 = vpop.f32.mrb[0].mxu0
  %v3276 = vadd.f32 %v3175, %v3275
  %v3277 = vpop.f32.mrb[0].mxu0
  %v3278 = vpop.f32.mrb[0].mxu0
  %v3279 = vadd.f32 %v3180, %v3278
  %v3280 = vpop.f32.mrb[0].mxu0
  %3281 = vmatprep.mubr.bf16.mxu0 0
  %3282 = vmatmul.mubr.bf16.gmra.mrb[0].mxu0 %v3223
  %v3283 = vpop.f32.mrb[0].mxu0
  %v3284 = vadd.f32 %v3185, %v3283
  %v3285 = vpop.f32.mrb[0].mxu0
  %v3286 = vpop.f32.mrb[0].mxu0
  %v3287 = vadd.f32 %v3190, %v3286
  %v3288 = vpop.f32.mrb[0].mxu0
  %3289 = vdwg.mxu0
  %vm3290 = vcmask 15360
  %3291 = vst.msk [vmem:[%s11] sm:$0xff] %vm3290, %v3260
  %3292 = vst.msk [vmem:[%s11 + $0x8] sm:$0xff] %vm3290, %v3263
  %3293 = vst.msk [vmem:[%s11 + $0x10] sm:$0xff] %vm3290, %v3268
  %3294 = vst.msk [vmem:[%s11 + $0x18] sm:$0xff] %vm3290, %v3271
  %3295 = vst.msk [vmem:[%s11 + $0x20] sm:$0xff] %vm3290, %v3276
  %3296 = vst.msk [vmem:[%s11 + $0x28] sm:$0xff] %vm3290, %v3279
  %3297 = vst.msk [vmem:[%s11 + $0x30] sm:$0xff] %vm3290, %v3284
  %3298 = vst.msk [vmem:[%s11 + $0x38] sm:$0xff] %vm3290, %v3287
  // Predicated region
  $region46: #{cnn_encoder_forward.1} parent=0 // pred_check
    _
  $region47: #{cnn_encoder_forward.1} parent=0 // pred_check_branch
    %3300 = sbr.rel (0) target = $region49
  $region48: #{cnn_encoder_forward.1} parent=0 // pred_region
    _
  $region49: #{cnn_encoder_forward.1} parent=0 // pred_fallthru
    _
  // Predicated region
  $region50: #{cnn_encoder_forward.1} parent=0 // pred_check
    _
  $region51: #{cnn_encoder_forward.1} parent=0 // pred_check_branch
    %3302 = sbr.rel (0) target = $region53
  $region52: #{cnn_encoder_forward.1} parent=0 // pred_region
    _
  $region53: #{cnn_encoder_forward.1} parent=0 // pred_fallthru
    _

</llo_original>
